<compile_context>
chip_gen: v7x
topology: tpu7x:2x2x1
jax: 0.10.0
libtpu: 0.0.40
codegen_flags: <defaults>
</compile_context>

<pallas_src>
import jax
import jax.numpy as jnp
from jax.experimental import pallas as pl
from jax.experimental.pallas import tpu as pltpu

NUM_MODELS = 15
HIDDEN = 768                  # fc projection width / classifier hidden width
N_OUT = 30                    # final number of labels
N_OUT_PAD = 128               # lane-dense padded output width
D_PAD = 32                    # per-model logits padded to a common width
K_EFF = NUM_MODELS * D_PAD    # 480: folded contraction width
K_PAD = 512                   # lane-dense padded contraction width
BATCH_ALIGN = 16              # bf16-friendly sublane multiple for batch tiles


# ---------------------------------------------------------------------------
# Pallas kernel: fused head after the offline fold.
#   out = tanh(x @ W_eff + b_eff) @ Wc2 + bc2
#   x     : (TB, 512)  bf16   concatenated padded per-model logits (batch tile)
#   W_eff : (512, 768) bf16   folded wfc_pad[k] @ wc1_block[k] (+ zero pad rows)
#   b_eff : (1, 768)   f32
#   Wc2   : (768, 128) bf16 (zero-padded cols 30..127), bc2 : (1, 128) f32
# ---------------------------------------------------------------------------
def _head_kernel(x_ref, w1_ref, b1_ref, w2_ref, b2_ref, out_ref):
    z = jnp.tanh(
        jnp.dot(x_ref[...], w1_ref[...], preferred_element_type=jnp.float32)
        + b1_ref[...])
    out_ref[...] = (
        jnp.dot(z.astype(jnp.bfloat16), w2_ref[...],
                preferred_element_type=jnp.float32)
        + b2_ref[...])


def _choose_tb(batch, tb_max=1024):
    """Batch tile: large (up to tb_max), aligned, and >=2 grid steps for big
    batches so the 'parallel' axis can shard across v7x's two TensorCores."""
    b_a = pl.cdiv(batch, BATCH_ALIGN) * BATCH_ALIGN
    tb = min(tb_max, b_a)
    if b_a >= 256:
        half = pl.cdiv(pl.cdiv(b_a, 2), BATCH_ALIGN) * BATCH_ALIGN
        tb = min(tb, half)
    return tb


def combine_heads(logits_cat, w_eff, b_eff, wc2, bc2, *, tb_max=1024):
    """logits_cat: (B, 512) bf16  ->  (B, 30) f32."""
    B, K = logits_cat.shape
    assert K == K_PAD, K
    TB = _choose_tb(B, tb_max)
    B_pad = pl.cdiv(B, TB) * TB
    if B_pad != B:
        logits_cat = jnp.pad(logits_cat, ((0, B_pad - B), (0, 0)))

    out = pl.pallas_call(
        _head_kernel,
        out_shape=jax.ShapeDtypeStruct((B_pad, N_OUT_PAD), jnp.float32),
        grid_spec=pltpu.PrefetchScalarGridSpec(
            num_scalar_prefetch=0,
            grid=(B_pad // TB,),
            in_specs=[
                pl.BlockSpec((TB, K_PAD),         lambda i: (i, 0)),
                pl.BlockSpec((K_PAD, HIDDEN),     lambda i: (0, 0)),
                pl.BlockSpec((1, HIDDEN),         lambda i: (0, 0)),
                pl.BlockSpec((HIDDEN, N_OUT_PAD), lambda i: (0, 0)),
                pl.BlockSpec((1, N_OUT_PAD),      lambda i: (0, 0)),
            ],
            out_specs=pl.BlockSpec((TB, N_OUT_PAD), lambda i: (i, 0)),
        ),
        compiler_params=pltpu.CompilerParams(
            dimension_semantics=("parallel",)),   # both TCs on v7x when grid>=2
    )(logits_cat, w_eff, b_eff, wc2, bc2)
    # drop padded batch rows and padded output lanes
    return out[:B, :N_OUT]


# ---------------------------------------------------------------------------
# Parameter construction (deterministic), offline weight folding, and glue
# ---------------------------------------------------------------------------
def _normal(key, shape, scale=0.02):
    return scale * jax.random.normal(key, shape, dtype=jnp.float32)


def build_params(key, vocab_size=100, enc_dim=64):
    keys = jax.random.split(key, 8)

    # num_labels per fold model: c1=2 (no_rel folds), c2=29 (rel folds), c3=30 (sota)
    num_labels = [2, 29, 2, 29, 2, 29, 2, 29, 2, 29, 30, 30, 30, 30, 30]

    # --- synthetic stand-in backbones (frozen pretrained RoBERTa replacements) ---
    bk = jax.random.split(keys[0], NUM_MODELS * 3)
    backbones = []
    for m in range(NUM_MODELS):
        emb = _normal(bk[3 * m + 0], (vocab_size, enc_dim), 0.1)
        w_head = _normal(bk[3 * m + 1], (enc_dim, num_labels[m]), 0.1)
        b_head = _normal(bk[3 * m + 2], (num_labels[m],), 0.1)
        backbones.append((emb, w_head, b_head))

    # --- fc1 (2->768), fc2 (29->768), fc3 (30->768) ---
    w_fc1 = _normal(keys[1], (2, HIDDEN));  b_fc1 = _normal(keys[1], (HIDDEN,))
    w_fc2 = _normal(keys[2], (29, HIDDEN)); b_fc2 = _normal(keys[2], (HIDDEN,))
    w_fc3 = _normal(keys[3], (30, HIDDEN)); b_fc3 = _normal(keys[3], (HIDDEN,))
    fc_map = {2: (w_fc1, b_fc1), 29: (w_fc2, b_fc2), 30: (w_fc3, b_fc3)}

    # per-model fc weights, zero-padded to (D_PAD, HIDDEN) so padded logits give
    # exactly the same result as the unpadded matmul
    wfc_pad = jnp.zeros((NUM_MODELS, D_PAD, HIDDEN), jnp.float32)
    bfc = jnp.zeros((NUM_MODELS, 1, HIDDEN), jnp.float32)
    for m, nl in enumerate(num_labels):
        w, b = fc_map[nl]
        wfc_pad = wfc_pad.at[m, :nl, :].set(w)
        bfc = bfc.at[m, 0, :].set(b)

    # --- classifier: Linear(768*15, 768) -> Tanh -> Linear(768, 30) ---
    wc1 = _normal(keys[4], (NUM_MODELS * HIDDEN, HIDDEN))
    bc1 = _normal(keys[5], (HIDDEN,))
    wc2 = _normal(keys[6], (HIDDEN, N_OUT))
    bc2 = _normal(keys[7], (N_OUT,))
    wc1_blocks = wc1.reshape(NUM_MODELS, HIDDEN, HIDDEN)

    # ----- offline fold (exact algebra in f32; weights frozen at inference) -----
    hi = jax.lax.Precision.HIGHEST
    # W_eff[k] = wfc_pad[k] @ wc1_blocks[k]   -> stacked (480, 768), padded to 512
    w_eff = jnp.einsum("kdh,khj->kdj", wfc_pad, wc1_blocks,
                       precision=hi).reshape(K_EFF, HIDDEN)
    w_eff_pad = jnp.zeros((K_PAD, HIDDEN), jnp.float32).at[:K_EFF, :].set(w_eff)
    # b_eff = sum_k bfc[k] @ wc1_blocks[k] + bc1 -> (1, 768)
    b_eff = jnp.einsum("kih,khj->ij", bfc, wc1_blocks, precision=hi) \
        + bc1.reshape(1, HIDDEN)

    # lane-dense padded final layer (zero columns 30..127)
    wc2_pad = jnp.zeros((HIDDEN, N_OUT_PAD), jnp.float32).at[:, :N_OUT].set(wc2)
    bc2_pad = jnp.zeros((1, N_OUT_PAD), jnp.float32).at[:, :N_OUT].set(bc2)

    return dict(num_labels=num_labels, backbones=backbones,
                # unfolded params (pure-JAX f32 reference)
                wfc_pad=wfc_pad, bfc=bfc,
                wc1=wc1, bc1=bc1.reshape(1, HIDDEN),
                wc2=wc2, bc2=bc2.reshape(1, N_OUT),
                # folded params consumed by the Pallas kernel
                w_eff_bf16=w_eff_pad.astype(jnp.bfloat16),
                b_eff=b_eff,
                wc2_bf16=wc2_pad.astype(jnp.bfloat16),
                bc2_pad=bc2_pad)


def standin_backbone_logits(params, input_ids, attention_mask):
    """Plain-JAX glue replacing the 15 frozen RoBERTa encoders.
    Returns padded logits stacked BATCH-MAJOR as (B, 15, D_PAD) f32."""
    mask = attention_mask.astype(jnp.float32)[..., None]          # (B, S, 1)
    denom = jnp.maximum(mask.sum(axis=1), 1.0)                    # (B, 1)
    out = []
    for m, (emb, w_head, b_head) in enumerate(params["backbones"]):
        tok = emb[input_ids]                                      # (B, S, E)
        pooled = (tok * mask).sum(axis=1) / denom                 # (B, E)
        logits = pooled @ w_head + b_head                         # (B, num_labels)
        pad = D_PAD - logits.shape[-1]
        out.append(jnp.pad(logits, ((0, 0), (0, pad))))
    return jnp.stack(out, axis=1)                                 # (B, 15, D_PAD)


def _cat_inputs(logits_pad):
    """(B, 15, 32) -> (B, 512) bf16 (lane-dense padded contraction)."""
    B = logits_pad.shape[0]
    cat = logits_pad.reshape(B, K_EFF)
    cat = jnp.pad(cat, ((0, 0), (0, K_PAD - K_EFF)))
    return cat.astype(jnp.bfloat16)


def combine_models_forward(params, input_ids, attention_mask):
    logits_pad = standin_backbone_logits(params, input_ids, attention_mask)
    x = _cat_inputs(logits_pad)
    return combine_heads(x, params["w_eff_bf16"], params["b_eff"],
                         params["wc2_bf16"], params["bc2_pad"])


def matched_reference(params, input_ids, attention_mask):
    """Pure-JAX reference using the SAME folded bf16 weights / casts as the
    kernel (isolates Pallas correctness from bf16 quantization)."""
    logits_pad = standin_backbone_logits(params, input_ids, attention_mask)
    x = _cat_inputs(logits_pad)
    z = jnp.tanh(jnp.dot(x, params["w_eff_bf16"],
                         preferred_element_type=jnp.float32) + params["b_eff"])
    out = jnp.dot(z.astype(jnp.bfloat16), params["wc2_bf16"],
                  preferred_element_type=jnp.float32) + params["bc2_pad"]
    return out[:, :N_OUT]


def reference_forward(params, input_ids, attention_mask):
    """Pure-JAX f32 reference of the UNFOLDED head
    (fc projections -> concat -> Dropout(id) -> Linear -> Tanh -> Dropout(id) -> Linear)."""
    logits_pad = standin_backbone_logits(params, input_ids, attention_mask)
    hs = []
    for m in range(NUM_MODELS):
        hs.append(logits_pad[:, m, :] @ params["wfc_pad"][m] + params["bfc"][m])
    cat = jnp.concatenate(hs, axis=-1)                            # (B, 11520)
    z = jnp.tanh(cat @ params["wc1"] + params["bc1"])
    return z @ params["wc2"] + params["bc2"]


if __name__ == "__main__":
    key = jax.random.PRNGKey(0)
    k_par, k_ids, k_len = jax.random.split(key, 3)

    B, S, VOCAB = 8, 16, 100
    params = build_params(k_par, vocab_size=VOCAB)

    input_ids = jax.random.randint(k_ids, (B, S), 0, VOCAB, dtype=jnp.int32)
    lens = jax.random.randint(k_len, (B,), 4, S + 1, dtype=jnp.int32)
    attention_mask = (jnp.arange(S)[None, :] < lens[:, None]).astype(jnp.int32)

    out = combine_models_forward(params, input_ids, attention_mask)
    out = jax.block_until_ready(out)
    assert out.shape == (B, N_OUT), out.shape

    # Tight check: kernel vs JAX with identical folded bf16 weights.
    ref_matched = matched_reference(params, input_ids, attention_mask)
    assert jnp.allclose(out, ref_matched, atol=1e-3, rtol=1e-3), \
        float(jnp.max(jnp.abs(out - ref_matched)))

    # Loose check: kernel vs unfolded f32 reference (accounts for bf16 weight
    # quantization + fold reassociation).
    ref_f32 = reference_forward(params, input_ids, attention_mask)
    assert jnp.allclose(out, ref_f32, atol=1e-2, rtol=1e-2), \
        float(jnp.max(jnp.abs(out - ref_f32)))

    print("KERNEL_OK")
</pallas_src>

<mosaic_0001>
module attributes {stable_mosaic.version = 11 : i64} {
  func.func @_head_kernel(%arg0: i32, %arg1: memref<16x512xbf16, #tpu.memory_space<vmem>>, %arg2: memref<512x768xbf16, #tpu.memory_space<vmem>>, %arg3: memref<1x768xf32, #tpu.memory_space<vmem>>, %arg4: memref<768x128xbf16, #tpu.memory_space<vmem>>, %arg5: memref<1x128xf32, #tpu.memory_space<vmem>>, %arg6: memref<16x128xf32, #tpu.memory_space<vmem>>) attributes {dimension_semantics = [#tpu.dimension_semantics<parallel>], iteration_bounds = array<i64: 1>, scalar_prefetch = 0 : i64, scratch_operands = 0 : i64, tpu.core_type = #tpu.core_type<tc>, window_params = [{transform_indices = @transform_0, window_bounds = array<i64: 16, 512>}, {pipeline_mode = #tpu.pipeline_mode<synchronous>, transform_indices = @transform_1, window_bounds = array<i64: 512, 768>}, {pipeline_mode = #tpu.pipeline_mode<synchronous>, transform_indices = @transform_2, window_bounds = array<i64: 1, 768>}, {pipeline_mode = #tpu.pipeline_mode<synchronous>, transform_indices = @transform_3, window_bounds = array<i64: 768, 128>}, {pipeline_mode = #tpu.pipeline_mode<synchronous>, transform_indices = @transform_4, window_bounds = array<i64: 1, 128>}, {transform_indices = @transform_5, window_bounds = array<i64: 16, 128>}]} {
    %c0 = arith.constant 0 : index
    %c0_0 = arith.constant 0 : index
    %0 = vector.load %arg1[%c0, %c0_0] : memref<16x512xbf16, #tpu.memory_space<vmem>>, vector<16x512xbf16>
    %c0_1 = arith.constant 0 : index
    %c0_2 = arith.constant 0 : index
    %1 = vector.load %arg2[%c0_1, %c0_2] : memref<512x768xbf16, #tpu.memory_space<vmem>>, vector<512x768xbf16>
    %cst = arith.constant dense<0.000000e+00> : vector<16x768xf32>
    %2 = tpu.matmul %0, %1, %cst {dimension_numbers = #tpu.dot_dimension_numbers<[1], [0], [0], [1], [0, 0, 1, 1], [], []>} : vector<16x512xbf16>, vector<512x768xbf16>, vector<16x768xf32> -> vector<16x768xf32>
    %c0_3 = arith.constant 0 : index
    %c0_4 = arith.constant 0 : index
    %3 = vector.load %arg3[%c0_3, %c0_4] : memref<1x768xf32, #tpu.memory_space<vmem>>, vector<1x768xf32>
    %4 = vector.broadcast %3 : vector<1x768xf32> to vector<16x768xf32>
    %5 = arith.addf %2, %4 : vector<16x768xf32>
    %6 = math.tanh %5 : vector<16x768xf32>
    %7 = arith.truncf %6 : vector<16x768xf32> to vector<16x768xbf16>
    %c0_5 = arith.constant 0 : index
    %c0_6 = arith.constant 0 : index
    %8 = vector.load %arg4[%c0_5, %c0_6] : memref<768x128xbf16, #tpu.memory_space<vmem>>, vector<768x128xbf16>
    %cst_7 = arith.constant dense<0.000000e+00> : vector<16x128xf32>
    %9 = tpu.matmul %7, %8, %cst_7 {dimension_numbers = #tpu.dot_dimension_numbers<[1], [0], [0], [1], [0, 0, 1, 1], [], []>} : vector<16x768xbf16>, vector<768x128xbf16>, vector<16x128xf32> -> vector<16x128xf32>
    %c0_8 = arith.constant 0 : index
    %c0_9 = arith.constant 0 : index
    %10 = vector.load %arg5[%c0_8, %c0_9] : memref<1x128xf32, #tpu.memory_space<vmem>>, vector<1x128xf32>
    %11 = vector.broadcast %10 : vector<1x128xf32> to vector<16x128xf32>
    %12 = arith.addf %9, %11 : vector<16x128xf32>
    %c0_10 = arith.constant 0 : index
    %c0_11 = arith.constant 0 : index
    %13 = vector.load %arg6[%c0_10, %c0_11] : memref<16x128xf32, #tpu.memory_space<vmem>>, vector<16x128xf32>
    tpu.vector_store %arg6[%c0_10, %c0_11], %12 {strides = array<i32>} : memref<16x128xf32, #tpu.memory_space<vmem>>, vector<16x128xf32>,
    return
  }
  func.func @transform_0(%arg0: i32) -> (i32, i32) {
    %c0_i32 = arith.constant 0 : i32
    %c0_i32_0 = arith.constant 0 : i32
    return %arg0, %c0_i32 : i32, i32
  }
  func.func @transform_1(%arg0: i32) -> (i32, i32) {
    %c0_i32 = arith.constant 0 : i32
    %c0_i32_0 = arith.constant 0 : i32
    %c0_i32_1 = arith.constant 0 : i32
    return %c0_i32, %c0_i32_0 : i32, i32
  }
  func.func @transform_2(%arg0: i32) -> (i32, i32) {
    %c0_i32 = arith.constant 0 : i32
    %c0_i32_0 = arith.constant 0 : i32
    %c0_i32_1 = arith.constant 0 : i32
    return %c0_i32, %c0_i32_0 : i32, i32
  }
  func.func @transform_3(%arg0: i32) -> (i32, i32) {
    %c0_i32 = arith.constant 0 : i32
    %c0_i32_0 = arith.constant 0 : i32
    %c0_i32_1 = arith.constant 0 : i32
    return %c0_i32, %c0_i32_0 : i32, i32
  }
  func.func @transform_4(%arg0: i32) -> (i32, i32) {
    %c0_i32 = arith.constant 0 : i32
    %c0_i32_0 = arith.constant 0 : i32
    %c0_i32_1 = arith.constant 0 : i32
    return %c0_i32, %c0_i32_0 : i32, i32
  }
  func.func @transform_5(%arg0: i32) -> (i32, i32) {
    %c0_i32 = arith.constant 0 : i32
    %c0_i32_0 = arith.constant 0 : i32
    return %arg0, %c0_i32 : i32, i32
  }
}

</mosaic_0001>

<llo_original>
// kernel: tpu_custom_call.1
$region0: #{tpu_custom_call.1}
  #allocation0 [shape = 'u32[]', space=smem, size = 0x4, offset = 0x4, fixed_abs, tag = 'smem constant byte address 0x4 - core index']
  #allocation1 [shape = 'u32[144,128]{1,0:T(1,128)}', space=vmem, size = 0x12000, scoped, tag = 'internal scratch']
  %s0 = inlined_call_operand.hbm [shape: bf16[16,512], index: 0, kind: input, shape index: {}]
  %s1 = inlined_call_operand.hbm [shape: bf16[512,768], index: 1, kind: input, shape index: {}]
  %s2 = inlined_call_operand.vmem [shape: f32[1,768], index: 2, kind: input, shape index: {}]
  %s3 = inlined_call_operand.hbm [shape: bf16[768,128], index: 3, kind: input, shape index: {}]
  %s4 = inlined_call_operand.vmem [shape: f32[1,128], index: 4, kind: input, shape index: {}]
  %s5 = inlined_call_operand.hbm [shape: f32[16,128], index: 5, kind: output, shape index: {}]
  %s6 = sld [smem:[#allocation0]]
  $region42: #{tpu_custom_call.1} parent=0
    _
  %s8 = ssub.s32 1, %s6
  %s9 = scalar_select 0, %s8, %s6
  $region1: #{tpu_custom_call.1} parent=0
    #allocation2 [shape = 'u8[16384]{0}', space=vmem, size = 0x4000, scoped, tag = 'input window, operand 0, single buffered']
    #allocation3 [shape = 's32[1]{0}', space=sflag, size = 0x4, scoped, tag = 'scoped memory for tpu_custom_call.1']
    #allocation4 [shape = 's32[1]{0}', space=sflag, size = 0x4, scoped, tag = 'scoped memory for tpu_custom_call.1']
    #allocation5 [shape = 'u8[786432]{0}', space=vmem, size = 0xc0000, scoped, tag = 'input window, operand 1, single buffered']
    #allocation6 [shape = 's32[1]{0}', space=sflag, size = 0x4, scoped, tag = 'scoped memory for tpu_custom_call.1']
    #allocation7 [shape = 'u8[196608]{0}', space=vmem, size = 0x30000, scoped, tag = 'input window, operand 3, single buffered']
    #allocation8 [shape = 'u8[8192]{0}', space=vmem, size = 0x2000, scoped, tag = 'output window, operand 0, single buffered']
    %10 = vsyncpa [#allocation3], 0
    %11 = vsyncpa [#allocation6], 0
    %12 = vsyncpa [#allocation4], 0
    // Predicated region
    $region2: #{tpu_custom_call.1} parent=1 // pred_check
      _
    $region3: #{tpu_custom_call.1} parent=1 // pred_check_branch
      %14 = sbr.rel (0) target = $region5
    $region4: #{tpu_custom_call.1} parent=1 // pred_region
      %s16 = ssub.s32 512, 512
      %17 = vsyncadd [#allocation3], %s16
      %s18 = sshll.u32 [#allocation2], 4
      %s19 = int_to_ptr.vmem [resolvable:$true] %s18
      %24 = dma.hbm_to_vmem [thread:$0]  %s0, 512, %s19, [#allocation3], 256, 256, 16
    $region5: #{tpu_custom_call.1} parent=1 // pred_fallthru
      _
    // Predicated region
    $region6: #{tpu_custom_call.1} parent=1 // pred_check
      _
    $region7: #{tpu_custom_call.1} parent=1 // pred_check_branch
      %26 = sbr.rel (0) target = $region9
    $region8: #{tpu_custom_call.1} parent=1 // pred_region
      %s28 = ssub.s32 24576, 24576
      %29 = vsyncadd [#allocation6], %s28
      %s30 = sshll.u32 [#allocation5], 4
      %s31 = int_to_ptr.vmem [resolvable:$true] %s30
      %36 = dma.hbm_to_vmem [thread:$0]  %s1, 24576, %s31, [#allocation6], 384, 384, 24
    $region9: #{tpu_custom_call.1} parent=1 // pred_fallthru
      _
    // Predicated region
    $region10: #{tpu_custom_call.1} parent=1 // pred_check
      _
    $region11: #{tpu_custom_call.1} parent=1 // pred_check_branch
      %38 = sbr.rel (0) target = $region13
    $region12: #{tpu_custom_call.1} parent=1 // pred_region
      _
    $region13: #{tpu_custom_call.1} parent=1 // pred_fallthru
      _
    // Predicated region
    $region14: #{tpu_custom_call.1} parent=1 // pred_check
      _
    $region15: #{tpu_custom_call.1} parent=1 // pred_check_branch
      %40 = sbr.rel (0) target = $region17
    $region16: #{tpu_custom_call.1} parent=1 // pred_region
      %s42 = ssub.s32 6144, 6144
      %43 = vsyncadd [#allocation6], %s42
      %s44 = sshll.u32 [#allocation7], 4
      %s45 = int_to_ptr.vmem [resolvable:$true] %s44
      %50 = dma.hbm_to_vmem [thread:$0]  %s3, 6144, %s45, [#allocation6], 64, 64, 4
    $region17: #{tpu_custom_call.1} parent=1 // pred_fallthru
      _
    // Predicated region
    $region18: #{tpu_custom_call.1} parent=1 // pred_check
      _
    $region19: #{tpu_custom_call.1} parent=1 // pred_check_branch
      %52 = sbr.rel (0) target = $region21
    $region20: #{tpu_custom_call.1} parent=1 // pred_region
      _
    $region21: #{tpu_custom_call.1} parent=1 // pred_fallthru
      _
    // Predicated region
    $region22: #{tpu_custom_call.1} parent=1 // pred_check
      _
    $region23: #{tpu_custom_call.1} parent=1 // pred_check_branch
      %54 = sbr.rel (0) target = $region25
    $region24: #{tpu_custom_call.1} parent=1 // pred_region
      %55 = dma.done [#allocation3], 512
    $region25: #{tpu_custom_call.1} parent=1 // pred_fallthru
      _
    // Predicated region
    $region26: #{tpu_custom_call.1} parent=1 // pred_check
      _
    $region27: #{tpu_custom_call.1} parent=1 // pred_check_branch
      %57 = sbr.rel (0) target = $region29
    $region28: #{tpu_custom_call.1} parent=1 // pred_region
      %58 = dma.done [#allocation6], 24576
    $region29: #{tpu_custom_call.1} parent=1 // pred_fallthru
      _
    // Predicated region
    $region30: #{tpu_custom_call.1} parent=1 // pred_check
      _
    $region31: #{tpu_custom_call.1} parent=1 // pred_check_branch
      %60 = sbr.rel (0) target = $region33
    $region32: #{tpu_custom_call.1} parent=1 // pred_region
      %61 = dma.done [#allocation6], 6144
    $region33: #{tpu_custom_call.1} parent=1 // pred_fallthru
      _
    %v63 = vld [vmem:[#allocation2] sm:$0xff]
    %v64 = vld [vmem:[#allocation2 + $0x8] sm:$0xff]
    %v65 = vld [vmem:[#allocation2 + $0x10] sm:$0xff]
    %v66 = vld [vmem:[#allocation2 + $0x18] sm:$0xff]
    %v67 = vld [vmem:[#allocation5] sm:$0xff]
    %v68 = vld [vmem:[#allocation5 + $0x8] sm:$0xff]
    %v69 = vld [vmem:[#allocation5 + $0x10] sm:$0xff]
    %v70 = vld [vmem:[#allocation5 + $0x18] sm:$0xff]
    %v71 = vld [vmem:[#allocation5 + $0x20] sm:$0xff]
    %v72 = vld [vmem:[#allocation5 + $0x28] sm:$0xff]
    %v73 = vld [vmem:[#allocation5 + $0x30] sm:$0xff]
    %v74 = vld [vmem:[#allocation5 + $0x38] sm:$0xff]
    %v75 = vld [vmem:[#allocation5 + $0x40] sm:$0xff]
    %v76 = vld [vmem:[#allocation5 + $0x48] sm:$0xff]
    %v77 = vld [vmem:[#allocation5 + $0x50] sm:$0xff]
    %v78 = vld [vmem:[#allocation5 + $0x58] sm:$0xff]
    %v79 = vld [vmem:[#allocation5 + $0x60] sm:$0xff]
    %v80 = vld [vmem:[#allocation5 + $0x68] sm:$0xff]
    %v81 = vld [vmem:[#allocation5 + $0x70] sm:$0xff]
    %v82 = vld [vmem:[#allocation5 + $0x78] sm:$0xff]
    %v83 = vld [vmem:[#allocation5 + $0x80] sm:$0xff]
    %v84 = vld [vmem:[#allocation5 + $0x88] sm:$0xff]
    %v85 = vld [vmem:[#allocation5 + $0x90] sm:$0xff]
    %v86 = vld [vmem:[#allocation5 + $0x98] sm:$0xff]
    %v87 = vld [vmem:[#allocation5 + $0xa0] sm:$0xff]
    %v88 = vld [vmem:[#allocation5 + $0xa8] sm:$0xff]
    %v89 = vld [vmem:[#allocation5 + $0xb0] sm:$0xff]
    %v90 = vld [vmem:[#allocation5 + $0xb8] sm:$0xff]
    %v91 = vld [vmem:[#allocation5 + $0xc0] sm:$0xff]
    %v92 = vld [vmem:[#allocation5 + $0xc8] sm:$0xff]
    %v93 = vld [vmem:[#allocation5 + $0xd0] sm:$0xff]
    %v94 = vld [vmem:[#allocation5 + $0xd8] sm:$0xff]
    %v95 = vld [vmem:[#allocation5 + $0xe0] sm:$0xff]
    %v96 = vld [vmem:[#allocation5 + $0xe8] sm:$0xff]
    %v97 = vld [vmem:[#allocation5 + $0xf0] sm:$0xff]
    %v98 = vld [vmem:[#allocation5 + $0xf8] sm:$0xff]
    %v99 = vld [vmem:[#allocation5 + $0x100] sm:$0xff]
    %v100 = vld [vmem:[#allocation5 + $0x108] sm:$0xff]
    %v101 = vld [vmem:[#allocation5 + $0x110] sm:$0xff]
    %v102 = vld [vmem:[#allocation5 + $0x118] sm:$0xff]
    %v103 = vld [vmem:[#allocation5 + $0x120] sm:$0xff]
    %v104 = vld [vmem:[#allocation5 + $0x128] sm:$0xff]
    %v105 = vld [vmem:[#allocation5 + $0x130] sm:$0xff]
    %v106 = vld [vmem:[#allocation5 + $0x138] sm:$0xff]
    %v107 = vld [vmem:[#allocation5 + $0x140] sm:$0xff]
    %v108 = vld [vmem:[#allocation5 + $0x148] sm:$0xff]
    %v109 = vld [vmem:[#allocation5 + $0x150] sm:$0xff]
    %v110 = vld [vmem:[#allocation5 + $0x158] sm:$0xff]
    %v111 = vld [vmem:[#allocation5 + $0x160] sm:$0xff]
    %v112 = vld [vmem:[#allocation5 + $0x168] sm:$0xff]
    %v113 = vld [vmem:[#allocation5 + $0x170] sm:$0xff]
    %v114 = vld [vmem:[#allocation5 + $0x178] sm:$0xff]
    %v115 = vld [vmem:[#allocation5 + $0x180] sm:$0xff]
    %v116 = vld [vmem:[#allocation5 + $0x188] sm:$0xff]
    %v117 = vld [vmem:[#allocation5 + $0x190] sm:$0xff]
    %v118 = vld [vmem:[#allocation5 + $0x198] sm:$0xff]
    %v119 = vld [vmem:[#allocation5 + $0x1a0] sm:$0xff]
    %v120 = vld [vmem:[#allocation5 + $0x1a8] sm:$0xff]
    %v121 = vld [vmem:[#allocation5 + $0x1b0] sm:$0xff]
    %v122 = vld [vmem:[#allocation5 + $0x1b8] sm:$0xff]
    %v123 = vld [vmem:[#allocation5 + $0x1c0] sm:$0xff]
    %v124 = vld [vmem:[#allocation5 + $0x1c8] sm:$0xff]
    %v125 = vld [vmem:[#allocation5 + $0x1d0] sm:$0xff]
    %v126 = vld [vmem:[#allocation5 + $0x1d8] sm:$0xff]
    %v127 = vld [vmem:[#allocation5 + $0x1e0] sm:$0xff]
    %v128 = vld [vmem:[#allocation5 + $0x1e8] sm:$0xff]
    %v129 = vld [vmem:[#allocation5 + $0x1f0] sm:$0xff]
    %v130 = vld [vmem:[#allocation5 + $0x1f8] sm:$0xff]
    %v131 = vld [vmem:[#allocation5 + $0x200] sm:$0xff]
    %v132 = vld [vmem:[#allocation5 + $0x208] sm:$0xff]
    %v133 = vld [vmem:[#allocation5 + $0x210] sm:$0xff]
    %v134 = vld [vmem:[#allocation5 + $0x218] sm:$0xff]
    %v135 = vld [vmem:[#allocation5 + $0x220] sm:$0xff]
    %v136 = vld [vmem:[#allocation5 + $0x228] sm:$0xff]
    %v137 = vld [vmem:[#allocation5 + $0x230] sm:$0xff]
    %v138 = vld [vmem:[#allocation5 + $0x238] sm:$0xff]
    %v139 = vld [vmem:[#allocation5 + $0x240] sm:$0xff]
    %v140 = vld [vmem:[#allocation5 + $0x248] sm:$0xff]
    %v141 = vld [vmem:[#allocation5 + $0x250] sm:$0xff]
    %v142 = vld [vmem:[#allocation5 + $0x258] sm:$0xff]
    %v143 = vld [vmem:[#allocation5 + $0x260] sm:$0xff]
    %v144 = vld [vmem:[#allocation5 + $0x268] sm:$0xff]
    %v145 = vld [vmem:[#allocation5 + $0x270] sm:$0xff]
    %v146 = vld [vmem:[#allocation5 + $0x278] sm:$0xff]
    %v147 = vld [vmem:[#allocation5 + $0x280] sm:$0xff]
    %v148 = vld [vmem:[#allocation5 + $0x288] sm:$0xff]
    %v149 = vld [vmem:[#allocation5 + $0x290] sm:$0xff]
    %v150 = vld [vmem:[#allocation5 + $0x298] sm:$0xff]
    %v151 = vld [vmem:[#allocation5 + $0x2a0] sm:$0xff]
    %v152 = vld [vmem:[#allocation5 + $0x2a8] sm:$0xff]
    %v153 = vld [vmem:[#allocation5 + $0x2b0] sm:$0xff]
    %v154 = vld [vmem:[#allocation5 + $0x2b8] sm:$0xff]
    %v155 = vld [vmem:[#allocation5 + $0x2c0] sm:$0xff]
    %v156 = vld [vmem:[#allocation5 + $0x2c8] sm:$0xff]
    %v157 = vld [vmem:[#allocation5 + $0x2d0] sm:$0xff]
    %v158 = vld [vmem:[#allocation5 + $0x2d8] sm:$0xff]
    %v159 = vld [vmem:[#allocation5 + $0x2e0] sm:$0xff]
    %v160 = vld [vmem:[#allocation5 + $0x2e8] sm:$0xff]
    %v161 = vld [vmem:[#allocation5 + $0x2f0] sm:$0xff]
    %v162 = vld [vmem:[#allocation5 + $0x2f8] sm:$0xff]
    %v163 = vld [vmem:[#allocation5 + $0x300] sm:$0xff]
    %v164 = vld [vmem:[#allocation5 + $0x308] sm:$0xff]
    %v165 = vld [vmem:[#allocation5 + $0x310] sm:$0xff]
    %v166 = vld [vmem:[#allocation5 + $0x318] sm:$0xff]
    %v167 = vld [vmem:[#allocation5 + $0x320] sm:$0xff]
    %v168 = vld [vmem:[#allocation5 + $0x328] sm:$0xff]
    %v169 = vld [vmem:[#allocation5 + $0x330] sm:$0xff]
    %v170 = vld [vmem:[#allocation5 + $0x338] sm:$0xff]
    %v171 = vld [vmem:[#allocation5 + $0x340] sm:$0xff]
    %v172 = vld [vmem:[#allocation5 + $0x348] sm:$0xff]
    %v173 = vld [vmem:[#allocation5 + $0x350] sm:$0xff]
    %v174 = vld [vmem:[#allocation5 + $0x358] sm:$0xff]
    %v175 = vld [vmem:[#allocation5 + $0x360] sm:$0xff]
    %v176 = vld [vmem:[#allocation5 + $0x368] sm:$0xff]
    %v177 = vld [vmem:[#allocation5 + $0x370] sm:$0xff]
    %v178 = vld [vmem:[#allocation5 + $0x378] sm:$0xff]
    %v179 = vld [vmem:[#allocation5 + $0x380] sm:$0xff]
    %v180 = vld [vmem:[#allocation5 + $0x388] sm:$0xff]
    %v181 = vld [vmem:[#allocation5 + $0x390] sm:$0xff]
    %v182 = vld [vmem:[#allocation5 + $0x398] sm:$0xff]
    %v183 = vld [vmem:[#allocation5 + $0x3a0] sm:$0xff]
    %v184 = vld [vmem:[#allocation5 + $0x3a8] sm:$0xff]
    %v185 = vld [vmem:[#allocation5 + $0x3b0] sm:$0xff]
    %v186 = vld [vmem:[#allocation5 + $0x3b8] sm:$0xff]
    %v187 = vld [vmem:[#allocation5 + $0x3c0] sm:$0xff]
    %v188 = vld [vmem:[#allocation5 + $0x3c8] sm:$0xff]
    %v189 = vld [vmem:[#allocation5 + $0x3d0] sm:$0xff]
    %v190 = vld [vmem:[#allocation5 + $0x3d8] sm:$0xff]
    %v191 = vld [vmem:[#allocation5 + $0x3e0] sm:$0xff]
    %v192 = vld [vmem:[#allocation5 + $0x3e8] sm:$0xff]
    %v193 = vld [vmem:[#allocation5 + $0x3f0] sm:$0xff]
    %v194 = vld [vmem:[#allocation5 + $0x3f8] sm:$0xff]
    %v195 = vld [vmem:[#allocation5 + $0x400] sm:$0xff]
    %v196 = vld [vmem:[#allocation5 + $0x408] sm:$0xff]
    %v197 = vld [vmem:[#allocation5 + $0x410] sm:$0xff]
    %v198 = vld [vmem:[#allocation5 + $0x418] sm:$0xff]
    %v199 = vld [vmem:[#allocation5 + $0x420] sm:$0xff]
    %v200 = vld [vmem:[#allocation5 + $0x428] sm:$0xff]
    %v201 = vld [vmem:[#allocation5 + $0x430] sm:$0xff]
    %v202 = vld [vmem:[#allocation5 + $0x438] sm:$0xff]
    %v203 = vld [vmem:[#allocation5 + $0x440] sm:$0xff]
    %v204 = vld [vmem:[#allocation5 + $0x448] sm:$0xff]
    %v205 = vld [vmem:[#allocation5 + $0x450] sm:$0xff]
    %v206 = vld [vmem:[#allocation5 + $0x458] sm:$0xff]
    %v207 = vld [vmem:[#allocation5 + $0x460] sm:$0xff]
    %v208 = vld [vmem:[#allocation5 + $0x468] sm:$0xff]
    %v209 = vld [vmem:[#allocation5 + $0x470] sm:$0xff]
    %v210 = vld [vmem:[#allocation5 + $0x478] sm:$0xff]
    %v211 = vld [vmem:[#allocation5 + $0x480] sm:$0xff]
    %v212 = vld [vmem:[#allocation5 + $0x488] sm:$0xff]
    %v213 = vld [vmem:[#allocation5 + $0x490] sm:$0xff]
    %v214 = vld [vmem:[#allocation5 + $0x498] sm:$0xff]
    %v215 = vld [vmem:[#allocation5 + $0x4a0] sm:$0xff]
    %v216 = vld [vmem:[#allocation5 + $0x4a8] sm:$0xff]
    %v217 = vld [vmem:[#allocation5 + $0x4b0] sm:$0xff]
    %v218 = vld [vmem:[#allocation5 + $0x4b8] sm:$0xff]
    %v219 = vld [vmem:[#allocation5 + $0x4c0] sm:$0xff]
    %v220 = vld [vmem:[#allocation5 + $0x4c8] sm:$0xff]
    %v221 = vld [vmem:[#allocation5 + $0x4d0] sm:$0xff]
    %v222 = vld [vmem:[#allocation5 + $0x4d8] sm:$0xff]
    %v223 = vld [vmem:[#allocation5 + $0x4e0] sm:$0xff]
    %v224 = vld [vmem:[#allocation5 + $0x4e8] sm:$0xff]
    %v225 = vld [vmem:[#allocation5 + $0x4f0] sm:$0xff]
    %v226 = vld [vmem:[#allocation5 + $0x4f8] sm:$0xff]
    %v227 = vld [vmem:[#allocation5 + $0x500] sm:$0xff]
    %v228 = vld [vmem:[#allocation5 + $0x508] sm:$0xff]
    %v229 = vld [vmem:[#allocation5 + $0x510] sm:$0xff]
    %v230 = vld [vmem:[#allocation5 + $0x518] sm:$0xff]
    %v231 = vld [vmem:[#allocation5 + $0x520] sm:$0xff]
    %v232 = vld [vmem:[#allocation5 + $0x528] sm:$0xff]
    %v233 = vld [vmem:[#allocation5 + $0x530] sm:$0xff]
    %v234 = vld [vmem:[#allocation5 + $0x538] sm:$0xff]
    %v235 = vld [vmem:[#allocation5 + $0x540] sm:$0xff]
    %v236 = vld [vmem:[#allocation5 + $0x548] sm:$0xff]
    %v237 = vld [vmem:[#allocation5 + $0x550] sm:$0xff]
    %v238 = vld [vmem:[#allocation5 + $0x558] sm:$0xff]
    %v239 = vld [vmem:[#allocation5 + $0x560] sm:$0xff]
    %v240 = vld [vmem:[#allocation5 + $0x568] sm:$0xff]
    %v241 = vld [vmem:[#allocation5 + $0x570] sm:$0xff]
    %v242 = vld [vmem:[#allocation5 + $0x578] sm:$0xff]
    %v243 = vld [vmem:[#allocation5 + $0x580] sm:$0xff]
    %v244 = vld [vmem:[#allocation5 + $0x588] sm:$0xff]
    %v245 = vld [vmem:[#allocation5 + $0x590] sm:$0xff]
    %v246 = vld [vmem:[#allocation5 + $0x598] sm:$0xff]
    %v247 = vld [vmem:[#allocation5 + $0x5a0] sm:$0xff]
    %v248 = vld [vmem:[#allocation5 + $0x5a8] sm:$0xff]
    %v249 = vld [vmem:[#allocation5 + $0x5b0] sm:$0xff]
    %v250 = vld [vmem:[#allocation5 + $0x5b8] sm:$0xff]
    %v251 = vld [vmem:[#allocation5 + $0x5c0] sm:$0xff]
    %v252 = vld [vmem:[#allocation5 + $0x5c8] sm:$0xff]
    %v253 = vld [vmem:[#allocation5 + $0x5d0] sm:$0xff]
    %v254 = vld [vmem:[#allocation5 + $0x5d8] sm:$0xff]
    %v255 = vld [vmem:[#allocation5 + $0x5e0] sm:$0xff]
    %v256 = vld [vmem:[#allocation5 + $0x5e8] sm:$0xff]
    %v257 = vld [vmem:[#allocation5 + $0x5f0] sm:$0xff]
    %v258 = vld [vmem:[#allocation5 + $0x5f8] sm:$0xff]
    %v259 = vld [vmem:[%s2] sm:$0x3f]
    %v261 = vlaneseq
    %v262 = vshrl.u32 %v261, 7
    %v263 = vsub.s32 0, %v262
    %v264 = vrot.slane %v259, %v263
    %v265 = vlaneseq
    %v266 = vshrl.u32 %v265, 7
    %v267 = vsub.s32 1, %v266
    %v268 = vrot.slane %v259, %v267
    %v269 = vlaneseq
    %v270 = vshrl.u32 %v269, 7
    %v271 = vsub.s32 2, %v270
    %v272 = vrot.slane %v259, %v271
    %v273 = vlaneseq
    %v274 = vshrl.u32 %v273, 7
    %v275 = vsub.s32 3, %v274
    %v276 = vrot.slane %v259, %v275
    %v277 = vlaneseq
    %v278 = vshrl.u32 %v277, 7
    %v279 = vsub.s32 4, %v278
    %v280 = vrot.slane %v259, %v279
    %v281 = vlaneseq
    %v282 = vshrl.u32 %v281, 7
    %v283 = vsub.s32 5, %v282
    %v284 = vrot.slane %v259, %v283
    %v295 = vunpack.c.l.b16 %v63
    %v296 = vunpack.c.h.b16 %v63
    %v297 = vunpack.c.l.b16 %v64
    %v298 = vunpack.c.h.b16 %v64
    %v299 = vunpack.c.l.b16 %v65
    %v300 = vunpack.c.h.b16 %v65
    %v301 = vunpack.c.l.b16 %v66
    %v302 = vunpack.c.h.b16 %v66
    %v303 = vpack.c.b16 %v299, %v295
    %v304 = vpack.c.b16 %v300, %v296
    %v305 = vpack.c.b16 %v301, %v297
    %v306 = vpack.c.b16 %v302, %v298
    %v503 = vunpack.c.l.b16 %v67
    %v504 = vunpack.c.h.b16 %v67
    %v505 = vunpack.c.l.b16 %v68
    %v506 = vunpack.c.h.b16 %v68
    %v507 = vunpack.c.l.b16 %v69
    %v508 = vunpack.c.h.b16 %v69
    %v509 = vunpack.c.l.b16 %v70
    %v510 = vunpack.c.h.b16 %v70
    %v511 = vunpack.c.l.b16 %v71
    %v512 = vunpack.c.h.b16 %v71
    %v513 = vunpack.c.l.b16 %v72
    %v514 = vunpack.c.h.b16 %v72
    %v515 = vunpack.c.l.b16 %v73
    %v516 = vunpack.c.h.b16 %v73
    %v517 = vunpack.c.l.b16 %v74
    %v518 = vunpack.c.h.b16 %v74
    %v519 = vunpack.c.l.b16 %v75
    %v520 = vunpack.c.h.b16 %v75
    %v521 = vunpack.c.l.b16 %v76
    %v522 = vunpack.c.h.b16 %v76
    %v523 = vunpack.c.l.b16 %v77
    %v524 = vunpack.c.h.b16 %v77
    %v525 = vunpack.c.l.b16 %v78
    %v526 = vunpack.c.h.b16 %v78
    %v527 = vunpack.c.l.b16 %v79
    %v528 = vunpack.c.h.b16 %v79
    %v529 = vunpack.c.l.b16 %v80
    %v530 = vunpack.c.h.b16 %v80
    %v531 = vunpack.c.l.b16 %v81
    %v532 = vunpack.c.h.b16 %v81
    %v533 = vunpack.c.l.b16 %v82
    %v534 = vunpack.c.h.b16 %v82
    %v535 = vunpack.c.l.b16 %v83
    %v536 = vunpack.c.h.b16 %v83
    %v537 = vunpack.c.l.b16 %v84
    %v538 = vunpack.c.h.b16 %v84
    %v539 = vunpack.c.l.b16 %v85
    %v540 = vunpack.c.h.b16 %v85
    %v541 = vunpack.c.l.b16 %v86
    %v542 = vunpack.c.h.b16 %v86
    %v543 = vunpack.c.l.b16 %v87
    %v544 = vunpack.c.h.b16 %v87
    %v545 = vunpack.c.l.b16 %v88
    %v546 = vunpack.c.h.b16 %v88
    %v547 = vunpack.c.l.b16 %v89
    %v548 = vunpack.c.h.b16 %v89
    %v549 = vunpack.c.l.b16 %v90
    %v550 = vunpack.c.h.b16 %v90
    %v551 = vunpack.c.l.b16 %v91
    %v552 = vunpack.c.h.b16 %v91
    %v553 = vunpack.c.l.b16 %v92
    %v554 = vunpack.c.h.b16 %v92
    %v555 = vunpack.c.l.b16 %v93
    %v556 = vunpack.c.h.b16 %v93
    %v557 = vunpack.c.l.b16 %v94
    %v558 = vunpack.c.h.b16 %v94
    %v559 = vunpack.c.l.b16 %v95
    %v560 = vunpack.c.h.b16 %v95
    %v561 = vunpack.c.l.b16 %v96
    %v562 = vunpack.c.h.b16 %v96
    %v563 = vunpack.c.l.b16 %v97
    %v564 = vunpack.c.h.b16 %v97
    %v565 = vunpack.c.l.b16 %v98
    %v566 = vunpack.c.h.b16 %v98
    %v567 = vunpack.c.l.b16 %v99
    %v568 = vunpack.c.h.b16 %v99
    %v569 = vunpack.c.l.b16 %v100
    %v570 = vunpack.c.h.b16 %v100
    %v571 = vunpack.c.l.b16 %v101
    %v572 = vunpack.c.h.b16 %v101
    %v573 = vunpack.c.l.b16 %v102
    %v574 = vunpack.c.h.b16 %v102
    %v575 = vunpack.c.l.b16 %v103
    %v576 = vunpack.c.h.b16 %v103
    %v577 = vunpack.c.l.b16 %v104
    %v578 = vunpack.c.h.b16 %v104
    %v579 = vunpack.c.l.b16 %v105
    %v580 = vunpack.c.h.b16 %v105
    %v581 = vunpack.c.l.b16 %v106
    %v582 = vunpack.c.h.b16 %v106
    %v583 = vunpack.c.l.b16 %v107
    %v584 = vunpack.c.h.b16 %v107
    %v585 = vunpack.c.l.b16 %v108
    %v586 = vunpack.c.h.b16 %v108
    %v587 = vunpack.c.l.b16 %v109
    %v588 = vunpack.c.h.b16 %v109
    %v589 = vunpack.c.l.b16 %v110
    %v590 = vunpack.c.h.b16 %v110
    %v591 = vunpack.c.l.b16 %v111
    %v592 = vunpack.c.h.b16 %v111
    %v593 = vunpack.c.l.b16 %v112
    %v594 = vunpack.c.h.b16 %v112
    %v595 = vunpack.c.l.b16 %v113
    %v596 = vunpack.c.h.b16 %v113
    %v597 = vunpack.c.l.b16 %v114
    %v598 = vunpack.c.h.b16 %v114
    %v599 = vunpack.c.l.b16 %v115
    %v600 = vunpack.c.h.b16 %v115
    %v601 = vunpack.c.l.b16 %v116
    %v602 = vunpack.c.h.b16 %v116
    %v603 = vunpack.c.l.b16 %v117
    %v604 = vunpack.c.h.b16 %v117
    %v605 = vunpack.c.l.b16 %v118
    %v606 = vunpack.c.h.b16 %v118
    %v607 = vunpack.c.l.b16 %v119
    %v608 = vunpack.c.h.b16 %v119
    %v609 = vunpack.c.l.b16 %v120
    %v610 = vunpack.c.h.b16 %v120
    %v611 = vunpack.c.l.b16 %v121
    %v612 = vunpack.c.h.b16 %v121
    %v613 = vunpack.c.l.b16 %v122
    %v614 = vunpack.c.h.b16 %v122
    %v615 = vunpack.c.l.b16 %v123
    %v616 = vunpack.c.h.b16 %v123
    %v617 = vunpack.c.l.b16 %v124
    %v618 = vunpack.c.h.b16 %v124
    %v619 = vunpack.c.l.b16 %v125
    %v620 = vunpack.c.h.b16 %v125
    %v621 = vunpack.c.l.b16 %v126
    %v622 = vunpack.c.h.b16 %v126
    %v623 = vunpack.c.l.b16 %v127
    %v624 = vunpack.c.h.b16 %v127
    %v625 = vunpack.c.l.b16 %v128
    %v626 = vunpack.c.h.b16 %v128
    %v627 = vunpack.c.l.b16 %v129
    %v628 = vunpack.c.h.b16 %v129
    %v629 = vunpack.c.l.b16 %v130
    %v630 = vunpack.c.h.b16 %v130
    %v631 = vunpack.c.l.b16 %v131
    %v632 = vunpack.c.h.b16 %v131
    %v633 = vunpack.c.l.b16 %v132
    %v634 = vunpack.c.h.b16 %v132
    %v635 = vunpack.c.l.b16 %v133
    %v636 = vunpack.c.h.b16 %v133
    %v637 = vunpack.c.l.b16 %v134
    %v638 = vunpack.c.h.b16 %v134
    %v639 = vunpack.c.l.b16 %v135
    %v640 = vunpack.c.h.b16 %v135
    %v641 = vunpack.c.l.b16 %v136
    %v642 = vunpack.c.h.b16 %v136
    %v643 = vunpack.c.l.b16 %v137
    %v644 = vunpack.c.h.b16 %v137
    %v645 = vunpack.c.l.b16 %v138
    %v646 = vunpack.c.h.b16 %v138
    %v647 = vunpack.c.l.b16 %v139
    %v648 = vunpack.c.h.b16 %v139
    %v649 = vunpack.c.l.b16 %v140
    %v650 = vunpack.c.h.b16 %v140
    %v651 = vunpack.c.l.b16 %v141
    %v652 = vunpack.c.h.b16 %v141
    %v653 = vunpack.c.l.b16 %v142
    %v654 = vunpack.c.h.b16 %v142
    %v655 = vunpack.c.l.b16 %v143
    %v656 = vunpack.c.h.b16 %v143
    %v657 = vunpack.c.l.b16 %v144
    %v658 = vunpack.c.h.b16 %v144
    %v659 = vunpack.c.l.b16 %v145
    %v660 = vunpack.c.h.b16 %v145
    %v661 = vunpack.c.l.b16 %v146
    %v662 = vunpack.c.h.b16 %v146
    %v663 = vunpack.c.l.b16 %v147
    %v664 = vunpack.c.h.b16 %v147
    %v665 = vunpack.c.l.b16 %v148
    %v666 = vunpack.c.h.b16 %v148
    %v667 = vunpack.c.l.b16 %v149
    %v668 = vunpack.c.h.b16 %v149
    %v669 = vunpack.c.l.b16 %v150
    %v670 = vunpack.c.h.b16 %v150
    %v671 = vunpack.c.l.b16 %v151
    %v672 = vunpack.c.h.b16 %v151
    %v673 = vunpack.c.l.b16 %v152
    %v674 = vunpack.c.h.b16 %v152
    %v675 = vunpack.c.l.b16 %v153
    %v676 = vunpack.c.h.b16 %v153
    %v677 = vunpack.c.l.b16 %v154
    %v678 = vunpack.c.h.b16 %v154
    %v679 = vunpack.c.l.b16 %v155
    %v680 = vunpack.c.h.b16 %v155
    %v681 = vunpack.c.l.b16 %v156
    %v682 = vunpack.c.h.b16 %v156
    %v683 = vunpack.c.l.b16 %v157
    %v684 = vunpack.c.h.b16 %v157
    %v685 = vunpack.c.l.b16 %v158
    %v686 = vunpack.c.h.b16 %v158
    %v687 = vunpack.c.l.b16 %v159
    %v688 = vunpack.c.h.b16 %v159
    %v689 = vunpack.c.l.b16 %v160
    %v690 = vunpack.c.h.b16 %v160
    %v691 = vunpack.c.l.b16 %v161
    %v692 = vunpack.c.h.b16 %v161
    %v693 = vunpack.c.l.b16 %v162
    %v694 = vunpack.c.h.b16 %v162
    %v695 = vunpack.c.l.b16 %v163
    %v696 = vunpack.c.h.b16 %v163
    %v697 = vunpack.c.l.b16 %v164
    %v698 = vunpack.c.h.b16 %v164
    %v699 = vunpack.c.l.b16 %v165
    %v700 = vunpack.c.h.b16 %v165
    %v701 = vunpack.c.l.b16 %v166
    %v702 = vunpack.c.h.b16 %v166
    %v703 = vunpack.c.l.b16 %v167
    %v704 = vunpack.c.h.b16 %v167
    %v705 = vunpack.c.l.b16 %v168
    %v706 = vunpack.c.h.b16 %v168
    %v707 = vunpack.c.l.b16 %v169
    %v708 = vunpack.c.h.b16 %v169
    %v709 = vunpack.c.l.b16 %v170
    %v710 = vunpack.c.h.b16 %v170
    %v711 = vunpack.c.l.b16 %v171
    %v712 = vunpack.c.h.b16 %v171
    %v713 = vunpack.c.l.b16 %v172
    %v714 = vunpack.c.h.b16 %v172
    %v715 = vunpack.c.l.b16 %v173
    %v716 = vunpack.c.h.b16 %v173
    %v717 = vunpack.c.l.b16 %v174
    %v718 = vunpack.c.h.b16 %v174
    %v719 = vunpack.c.l.b16 %v175
    %v720 = vunpack.c.h.b16 %v175
    %v721 = vunpack.c.l.b16 %v176
    %v722 = vunpack.c.h.b16 %v176
    %v723 = vunpack.c.l.b16 %v177
    %v724 = vunpack.c.h.b16 %v177
    %v725 = vunpack.c.l.b16 %v178
    %v726 = vunpack.c.h.b16 %v178
    %v727 = vunpack.c.l.b16 %v179
    %v728 = vunpack.c.h.b16 %v179
    %v729 = vunpack.c.l.b16 %v180
    %v730 = vunpack.c.h.b16 %v180
    %v731 = vunpack.c.l.b16 %v181
    %v732 = vunpack.c.h.b16 %v181
    %v733 = vunpack.c.l.b16 %v182
    %v734 = vunpack.c.h.b16 %v182
    %v735 = vunpack.c.l.b16 %v183
    %v736 = vunpack.c.h.b16 %v183
    %v737 = vunpack.c.l.b16 %v184
    %v738 = vunpack.c.h.b16 %v184
    %v739 = vunpack.c.l.b16 %v185
    %v740 = vunpack.c.h.b16 %v185
    %v741 = vunpack.c.l.b16 %v186
    %v742 = vunpack.c.h.b16 %v186
    %v743 = vunpack.c.l.b16 %v187
    %v744 = vunpack.c.h.b16 %v187
    %v745 = vunpack.c.l.b16 %v188
    %v746 = vunpack.c.h.b16 %v188
    %v747 = vunpack.c.l.b16 %v189
    %v748 = vunpack.c.h.b16 %v189
    %v749 = vunpack.c.l.b16 %v190
    %v750 = vunpack.c.h.b16 %v190
    %v751 = vunpack.c.l.b16 %v191
    %v752 = vunpack.c.h.b16 %v191
    %v753 = vunpack.c.l.b16 %v192
    %v754 = vunpack.c.h.b16 %v192
    %v755 = vunpack.c.l.b16 %v193
    %v756 = vunpack.c.h.b16 %v193
    %v757 = vunpack.c.l.b16 %v194
    %v758 = vunpack.c.h.b16 %v194
    %v759 = vunpack.c.l.b16 %v195
    %v760 = vunpack.c.h.b16 %v195
    %v761 = vunpack.c.l.b16 %v196
    %v762 = vunpack.c.h.b16 %v196
    %v763 = vunpack.c.l.b16 %v197
    %v764 = vunpack.c.h.b16 %v197
    %v765 = vunpack.c.l.b16 %v198
    %v766 = vunpack.c.h.b16 %v198
    %v767 = vunpack.c.l.b16 %v199
    %v768 = vunpack.c.h.b16 %v199
    %v769 = vunpack.c.l.b16 %v200
    %v770 = vunpack.c.h.b16 %v200
    %v771 = vunpack.c.l.b16 %v201
    %v772 = vunpack.c.h.b16 %v201
    %v773 = vunpack.c.l.b16 %v202
    %v774 = vunpack.c.h.b16 %v202
    %v775 = vunpack.c.l.b16 %v203
    %v776 = vunpack.c.h.b16 %v203
    %v777 = vunpack.c.l.b16 %v204
    %v778 = vunpack.c.h.b16 %v204
    %v779 = vunpack.c.l.b16 %v205
    %v780 = vunpack.c.h.b16 %v205
    %v781 = vunpack.c.l.b16 %v206
    %v782 = vunpack.c.h.b16 %v206
    %v783 = vunpack.c.l.b16 %v207
    %v784 = vunpack.c.h.b16 %v207
    %v785 = vunpack.c.l.b16 %v208
    %v786 = vunpack.c.h.b16 %v208
    %v787 = vunpack.c.l.b16 %v209
    %v788 = vunpack.c.h.b16 %v209
    %v789 = vunpack.c.l.b16 %v210
    %v790 = vunpack.c.h.b16 %v210
    %v791 = vunpack.c.l.b16 %v211
    %v792 = vunpack.c.h.b16 %v211
    %v793 = vunpack.c.l.b16 %v212
    %v794 = vunpack.c.h.b16 %v212
    %v795 = vunpack.c.l.b16 %v213
    %v796 = vunpack.c.h.b16 %v213
    %v797 = vunpack.c.l.b16 %v214
    %v798 = vunpack.c.h.b16 %v214
    %v799 = vunpack.c.l.b16 %v215
    %v800 = vunpack.c.h.b16 %v215
    %v801 = vunpack.c.l.b16 %v216
    %v802 = vunpack.c.h.b16 %v216
    %v803 = vunpack.c.l.b16 %v217
    %v804 = vunpack.c.h.b16 %v217
    %v805 = vunpack.c.l.b16 %v218
    %v806 = vunpack.c.h.b16 %v218
    %v807 = vunpack.c.l.b16 %v219
    %v808 = vunpack.c.h.b16 %v219
    %v809 = vunpack.c.l.b16 %v220
    %v810 = vunpack.c.h.b16 %v220
    %v811 = vunpack.c.l.b16 %v221
    %v812 = vunpack.c.h.b16 %v221
    %v813 = vunpack.c.l.b16 %v222
    %v814 = vunpack.c.h.b16 %v222
    %v815 = vunpack.c.l.b16 %v223
    %v816 = vunpack.c.h.b16 %v223
    %v817 = vunpack.c.l.b16 %v224
    %v818 = vunpack.c.h.b16 %v224
    %v819 = vunpack.c.l.b16 %v225
    %v820 = vunpack.c.h.b16 %v225
    %v821 = vunpack.c.l.b16 %v226
    %v822 = vunpack.c.h.b16 %v226
    %v823 = vunpack.c.l.b16 %v227
    %v824 = vunpack.c.h.b16 %v227
    %v825 = vunpack.c.l.b16 %v228
    %v826 = vunpack.c.h.b16 %v228
    %v827 = vunpack.c.l.b16 %v229
    %v828 = vunpack.c.h.b16 %v229
    %v829 = vunpack.c.l.b16 %v230
    %v830 = vunpack.c.h.b16 %v230
    %v831 = vunpack.c.l.b16 %v231
    %v832 = vunpack.c.h.b16 %v231
    %v833 = vunpack.c.l.b16 %v232
    %v834 = vunpack.c.h.b16 %v232
    %v835 = vunpack.c.l.b16 %v233
    %v836 = vunpack.c.h.b16 %v233
    %v837 = vunpack.c.l.b16 %v234
    %v838 = vunpack.c.h.b16 %v234
    %v839 = vunpack.c.l.b16 %v235
    %v840 = vunpack.c.h.b16 %v235
    %v841 = vunpack.c.l.b16 %v236
    %v842 = vunpack.c.h.b16 %v236
    %v843 = vunpack.c.l.b16 %v237
    %v844 = vunpack.c.h.b16 %v237
    %v845 = vunpack.c.l.b16 %v238
    %v846 = vunpack.c.h.b16 %v238
    %v847 = vunpack.c.l.b16 %v239
    %v848 = vunpack.c.h.b16 %v239
    %v849 = vunpack.c.l.b16 %v240
    %v850 = vunpack.c.h.b16 %v240
    %v851 = vunpack.c.l.b16 %v241
    %v852 = vunpack.c.h.b16 %v241
    %v853 = vunpack.c.l.b16 %v242
    %v854 = vunpack.c.h.b16 %v242
    %v855 = vunpack.c.l.b16 %v243
    %v856 = vunpack.c.h.b16 %v243
    %v857 = vunpack.c.l.b16 %v244
    %v858 = vunpack.c.h.b16 %v244
    %v859 = vunpack.c.l.b16 %v245
    %v860 = vunpack.c.h.b16 %v245
    %v861 = vunpack.c.l.b16 %v246
    %v862 = vunpack.c.h.b16 %v246
    %v863 = vunpack.c.l.b16 %v247
    %v864 = vunpack.c.h.b16 %v247
    %v865 = vunpack.c.l.b16 %v248
    %v866 = vunpack.c.h.b16 %v248
    %v867 = vunpack.c.l.b16 %v249
    %v868 = vunpack.c.h.b16 %v249
    %v869 = vunpack.c.l.b16 %v250
    %v870 = vunpack.c.h.b16 %v250
    %v871 = vunpack.c.l.b16 %v251
    %v872 = vunpack.c.h.b16 %v251
    %v873 = vunpack.c.l.b16 %v252
    %v874 = vunpack.c.h.b16 %v252
    %v875 = vunpack.c.l.b16 %v253
    %v876 = vunpack.c.h.b16 %v253
    %v877 = vunpack.c.l.b16 %v254
    %v878 = vunpack.c.h.b16 %v254
    %v879 = vunpack.c.l.b16 %v255
    %v880 = vunpack.c.h.b16 %v255
    %v881 = vunpack.c.l.b16 %v256
    %v882 = vunpack.c.h.b16 %v256
    %v883 = vunpack.c.l.b16 %v257
    %v884 = vunpack.c.h.b16 %v257
    %v885 = vunpack.c.l.b16 %v258
    %v886 = vunpack.c.h.b16 %v258
    %v887 = vpack.c.b16 %v509, %v503
    %v888 = vpack.c.b16 %v510, %v504
    %v889 = vpack.c.b16 %v511, %v505
    %v890 = vpack.c.b16 %v512, %v506
    %v891 = vpack.c.b16 %v513, %v507
    %v892 = vpack.c.b16 %v514, %v508
    %v893 = vpack.c.b16 %v521, %v515
    %v894 = vpack.c.b16 %v522, %v516
    %v895 = vpack.c.b16 %v523, %v517
    %v896 = vpack.c.b16 %v524, %v518
    %v897 = vpack.c.b16 %v525, %v519
    %v898 = vpack.c.b16 %v526, %v520
    %v899 = vpack.c.b16 %v533, %v527
    %v900 = vpack.c.b16 %v534, %v528
    %v901 = vpack.c.b16 %v535, %v529
    %v902 = vpack.c.b16 %v536, %v530
    %v903 = vpack.c.b16 %v537, %v531
    %v904 = vpack.c.b16 %v538, %v532
    %v905 = vpack.c.b16 %v545, %v539
    %v906 = vpack.c.b16 %v546, %v540
    %v907 = vpack.c.b16 %v547, %v541
    %v908 = vpack.c.b16 %v548, %v542
    %v909 = vpack.c.b16 %v549, %v543
    %v910 = vpack.c.b16 %v550, %v544
    %v911 = vpack.c.b16 %v557, %v551
    %v912 = vpack.c.b16 %v558, %v552
    %v913 = vpack.c.b16 %v559, %v553
    %v914 = vpack.c.b16 %v560, %v554
    %v915 = vpack.c.b16 %v561, %v555
    %v916 = vpack.c.b16 %v562, %v556
    %v917 = vpack.c.b16 %v569, %v563
    %v918 = vpack.c.b16 %v570, %v564
    %v919 = vpack.c.b16 %v571, %v565
    %v920 = vpack.c.b16 %v572, %v566
    %v921 = vpack.c.b16 %v573, %v567
    %v922 = vpack.c.b16 %v574, %v568
    %v923 = vpack.c.b16 %v581, %v575
    %v924 = vpack.c.b16 %v582, %v576
    %v925 = vpack.c.b16 %v583, %v577
    %v926 = vpack.c.b16 %v584, %v578
    %v927 = vpack.c.b16 %v585, %v579
    %v928 = vpack.c.b16 %v586, %v580
    %v929 = vpack.c.b16 %v593, %v587
    %v930 = vpack.c.b16 %v594, %v588
    %v931 = vpack.c.b16 %v595, %v589
    %v932 = vpack.c.b16 %v596, %v590
    %v933 = vpack.c.b16 %v597, %v591
    %v934 = vpack.c.b16 %v598, %v592
    %v935 = vpack.c.b16 %v605, %v599
    %v936 = vpack.c.b16 %v606, %v600
    %v937 = vpack.c.b16 %v607, %v601
    %v938 = vpack.c.b16 %v608, %v602
    %v939 = vpack.c.b16 %v609, %v603
    %v940 = vpack.c.b16 %v610, %v604
    %v941 = vpack.c.b16 %v617, %v611
    %v942 = vpack.c.b16 %v618, %v612
    %v943 = vpack.c.b16 %v619, %v613
    %v944 = vpack.c.b16 %v620, %v614
    %v945 = vpack.c.b16 %v621, %v615
    %v946 = vpack.c.b16 %v622, %v616
    %v947 = vpack.c.b16 %v629, %v623
    %v948 = vpack.c.b16 %v630, %v624
    %v949 = vpack.c.b16 %v631, %v625
    %v950 = vpack.c.b16 %v632, %v626
    %v951 = vpack.c.b16 %v633, %v627
    %v952 = vpack.c.b16 %v634, %v628
    %v953 = vpack.c.b16 %v641, %v635
    %v954 = vpack.c.b16 %v642, %v636
    %v955 = vpack.c.b16 %v643, %v637
    %v956 = vpack.c.b16 %v644, %v638
    %v957 = vpack.c.b16 %v645, %v639
    %v958 = vpack.c.b16 %v646, %v640
    %v959 = vpack.c.b16 %v653, %v647
    %v960 = vpack.c.b16 %v654, %v648
    %v961 = vpack.c.b16 %v655, %v649
    %v962 = vpack.c.b16 %v656, %v650
    %v963 = vpack.c.b16 %v657, %v651
    %v964 = vpack.c.b16 %v658, %v652
    %v965 = vpack.c.b16 %v665, %v659
    %v966 = vpack.c.b16 %v666, %v660
    %v967 = vpack.c.b16 %v667, %v661
    %v968 = vpack.c.b16 %v668, %v662
    %v969 = vpack.c.b16 %v669, %v663
    %v970 = vpack.c.b16 %v670, %v664
    %v971 = vpack.c.b16 %v677, %v671
    %v972 = vpack.c.b16 %v678, %v672
    %v973 = vpack.c.b16 %v679, %v673
    %v974 = vpack.c.b16 %v680, %v674
    %v975 = vpack.c.b16 %v681, %v675
    %v976 = vpack.c.b16 %v682, %v676
    %v977 = vpack.c.b16 %v689, %v683
    %v978 = vpack.c.b16 %v690, %v684
    %v979 = vpack.c.b16 %v691, %v685
    %v980 = vpack.c.b16 %v692, %v686
    %v981 = vpack.c.b16 %v693, %v687
    %v982 = vpack.c.b16 %v694, %v688
    %v983 = vpack.c.b16 %v701, %v695
    %v984 = vpack.c.b16 %v702, %v696
    %v985 = vpack.c.b16 %v703, %v697
    %v986 = vpack.c.b16 %v704, %v698
    %v987 = vpack.c.b16 %v705, %v699
    %v988 = vpack.c.b16 %v706, %v700
    %v989 = vpack.c.b16 %v713, %v707
    %v990 = vpack.c.b16 %v714, %v708
    %v991 = vpack.c.b16 %v715, %v709
    %v992 = vpack.c.b16 %v716, %v710
    %v993 = vpack.c.b16 %v717, %v711
    %v994 = vpack.c.b16 %v718, %v712
    %v995 = vpack.c.b16 %v725, %v719
    %v996 = vpack.c.b16 %v726, %v720
    %v997 = vpack.c.b16 %v727, %v721
    %v998 = vpack.c.b16 %v728, %v722
    %v999 = vpack.c.b16 %v729, %v723
    %v1000 = vpack.c.b16 %v730, %v724
    %v1001 = vpack.c.b16 %v737, %v731
    %v1002 = vpack.c.b16 %v738, %v732
    %v1003 = vpack.c.b16 %v739, %v733
    %v1004 = vpack.c.b16 %v740, %v734
    %v1005 = vpack.c.b16 %v741, %v735
    %v1006 = vpack.c.b16 %v742, %v736
    %v1007 = vpack.c.b16 %v749, %v743
    %v1008 = vpack.c.b16 %v750, %v744
    %v1009 = vpack.c.b16 %v751, %v745
    %v1010 = vpack.c.b16 %v752, %v746
    %v1011 = vpack.c.b16 %v753, %v747
    %v1012 = vpack.c.b16 %v754, %v748
    %v1013 = vpack.c.b16 %v761, %v755
    %v1014 = vpack.c.b16 %v762, %v756
    %v1015 = vpack.c.b16 %v763, %v757
    %v1016 = vpack.c.b16 %v764, %v758
    %v1017 = vpack.c.b16 %v765, %v759
    %v1018 = vpack.c.b16 %v766, %v760
    %v1019 = vpack.c.b16 %v773, %v767
    %v1020 = vpack.c.b16 %v774, %v768
    %v1021 = vpack.c.b16 %v775, %v769
    %v1022 = vpack.c.b16 %v776, %v770
    %v1023 = vpack.c.b16 %v777, %v771
    %v1024 = vpack.c.b16 %v778, %v772
    %v1025 = vpack.c.b16 %v785, %v779
    %v1026 = vpack.c.b16 %v786, %v780
    %v1027 = vpack.c.b16 %v787, %v781
    %v1028 = vpack.c.b16 %v788, %v782
    %v1029 = vpack.c.b16 %v789, %v783
    %v1030 = vpack.c.b16 %v790, %v784
    %v1031 = vpack.c.b16 %v797, %v791
    %v1032 = vpack.c.b16 %v798, %v792
    %v1033 = vpack.c.b16 %v799, %v793
    %v1034 = vpack.c.b16 %v800, %v794
    %v1035 = vpack.c.b16 %v801, %v795
    %v1036 = vpack.c.b16 %v802, %v796
    %v1037 = vpack.c.b16 %v809, %v803
    %v1038 = vpack.c.b16 %v810, %v804
    %v1039 = vpack.c.b16 %v811, %v805
    %v1040 = vpack.c.b16 %v812, %v806
    %v1041 = vpack.c.b16 %v813, %v807
    %v1042 = vpack.c.b16 %v814, %v808
    %v1043 = vpack.c.b16 %v821, %v815
    %v1044 = vpack.c.b16 %v822, %v816
    %v1045 = vpack.c.b16 %v823, %v817
    %v1046 = vpack.c.b16 %v824, %v818
    %v1047 = vpack.c.b16 %v825, %v819
    %v1048 = vpack.c.b16 %v826, %v820
    %v1049 = vpack.c.b16 %v833, %v827
    %v1050 = vpack.c.b16 %v834, %v828
    %v1051 = vpack.c.b16 %v835, %v829
    %v1052 = vpack.c.b16 %v836, %v830
    %v1053 = vpack.c.b16 %v837, %v831
    %v1054 = vpack.c.b16 %v838, %v832
    %v1055 = vpack.c.b16 %v845, %v839
    %v1056 = vpack.c.b16 %v846, %v840
    %v1057 = vpack.c.b16 %v847, %v841
    %v1058 = vpack.c.b16 %v848, %v842
    %v1059 = vpack.c.b16 %v849, %v843
    %v1060 = vpack.c.b16 %v850, %v844
    %v1061 = vpack.c.b16 %v857, %v851
    %v1062 = vpack.c.b16 %v858, %v852
    %v1063 = vpack.c.b16 %v859, %v853
    %v1064 = vpack.c.b16 %v860, %v854
    %v1065 = vpack.c.b16 %v861, %v855
    %v1066 = vpack.c.b16 %v862, %v856
    %v1067 = vpack.c.b16 %v869, %v863
    %v1068 = vpack.c.b16 %v870, %v864
    %v1069 = vpack.c.b16 %v871, %v865
    %v1070 = vpack.c.b16 %v872, %v866
    %v1071 = vpack.c.b16 %v873, %v867
    %v1072 = vpack.c.b16 %v874, %v868
    %v1073 = vpack.c.b16 %v881, %v875
    %v1074 = vpack.c.b16 %v882, %v876
    %v1075 = vpack.c.b16 %v883, %v877
    %v1076 = vpack.c.b16 %v884, %v878
    %v1077 = vpack.c.b16 %v885, %v879
    %v1078 = vpack.c.b16 %v886, %v880
    %1271 = vmatprep.subr.bf16.mxu0 %v888
    %1272 = vmatpush1.bf16.msra.mxu0 %v887
    %1273 = vmatprep.subr.bf16.mxu0 %v894
    %1274 = vmatpush1.bf16.msra.mxu0 %v893
    %1275 = vmatprep.subr.bf16.mxu0 %v900
    %1276 = vmatpush1.bf16.msra.mxu0 %v899
    %1277 = vmatprep.subr.bf16.mxu0 %v906
    %1278 = vmatpush1.bf16.msra.mxu0 %v905
    %1279 = vmatprep.subr.bf16.mxu0 %v912
    %1280 = vmatpush1.bf16.msra.mxu0 %v911
    %1281 = vmatprep.subr.bf16.mxu0 %v918
    %1282 = vmatpush1.bf16.msra.mxu0 %v917
    %1283 = vmatprep.subr.bf16.mxu0 %v924
    %1284 = vmatpush1.bf16.msra.mxu0 %v923
    %1285 = vmatprep.subr.bf16.mxu0 %v930
    %1286 = vmatpush1.bf16.msra.mxu0 %v929
    %1287 = vmatprep.subr.bf16.mxu0 %v936
    %1288 = vmatpush1.bf16.msra.mxu0 %v935
    %1289 = vmatprep.subr.bf16.mxu0 %v942
    %1290 = vmatpush1.bf16.msra.mxu0 %v941
    %1291 = vmatprep.subr.bf16.mxu0 %v948
    %1292 = vmatpush1.bf16.msra.mxu0 %v947
    %1293 = vmatprep.subr.bf16.mxu0 %v954
    %1294 = vmatpush1.bf16.msra.mxu0 %v953
    %1295 = vmatprep.subr.bf16.mxu0 %v960
    %1296 = vmatpush1.bf16.msra.mxu0 %v959
    %1297 = vmatprep.subr.bf16.mxu0 %v966
    %1298 = vmatpush1.bf16.msra.mxu0 %v965
    %1299 = vmatprep.subr.bf16.mxu0 %v972
    %1300 = vmatpush1.bf16.msra.mxu0 %v971
    %1301 = vmatprep.subr.bf16.mxu0 %v978
    %1302 = vmatpush1.bf16.msra.mxu0 %v977
    %1303 = vmatprep.mubr.bf16.mxu0 %v304
    %1304 = vmatmul.mubr.bf16.gmra.mrb[0].mxu0 %v303
    %v1305 = vpop.f32.mrb[0].mxu0
    %v1306 = vadd.f32 %v264, %v1305
    %v1307 = vpop.f32.mrb[0].mxu0
    %v1308 = vadd.f32 %v268, %v1307
    %v1309 = vpop.f32.mrb[0].mxu0
    %v1310 = vadd.f32 %v264, %v1309
    %v1311 = vpop.f32.mrb[0].mxu0
    %v1312 = vadd.f32 %v268, %v1311
    %1313 = vdwg.mxu0
    %1314 = vmatprep.subr.bf16.mxu0 %v984
    %1315 = vmatpush1.bf16.msra.mxu0 %v983
    %1316 = vmatprep.subr.bf16.mxu0 %v990
    %1317 = vmatpush1.bf16.msra.mxu0 %v989
    %1318 = vmatprep.subr.bf16.mxu0 %v996
    %1319 = vmatpush1.bf16.msra.mxu0 %v995
    %1320 = vmatprep.subr.bf16.mxu0 %v1002
    %1321 = vmatpush1.bf16.msra.mxu0 %v1001
    %1322 = vmatprep.subr.bf16.mxu0 %v1008
    %1323 = vmatpush1.bf16.msra.mxu0 %v1007
    %1324 = vmatprep.subr.bf16.mxu0 %v1014
    %1325 = vmatpush1.bf16.msra.mxu0 %v1013
    %1326 = vmatprep.subr.bf16.mxu0 %v1020
    %1327 = vmatpush1.bf16.msra.mxu0 %v1019
    %1328 = vmatprep.subr.bf16.mxu0 %v1026
    %1329 = vmatpush1.bf16.msra.mxu0 %v1025
    %1330 = vmatprep.subr.bf16.mxu0 %v1032
    %1331 = vmatpush1.bf16.msra.mxu0 %v1031
    %1332 = vmatprep.subr.bf16.mxu0 %v1038
    %1333 = vmatpush1.bf16.msra.mxu0 %v1037
    %1334 = vmatprep.subr.bf16.mxu0 %v1044
    %1335 = vmatpush1.bf16.msra.mxu0 %v1043
    %1336 = vmatprep.subr.bf16.mxu0 %v1050
    %1337 = vmatpush1.bf16.msra.mxu0 %v1049
    %1338 = vmatprep.subr.bf16.mxu0 %v1056
    %1339 = vmatpush1.bf16.msra.mxu0 %v1055
    %1340 = vmatprep.subr.bf16.mxu0 %v1062
    %1341 = vmatpush1.bf16.msra.mxu0 %v1061
    %1342 = vmatprep.subr.bf16.mxu0 %v1068
    %1343 = vmatpush1.bf16.msra.mxu0 %v1067
    %1344 = vmatprep.subr.bf16.mxu0 %v1074
    %1345 = vmatpush1.bf16.msra.mxu0 %v1073
    %1346 = vmatprep.mubr.bf16.mxu0 %v306
    %1347 = vmatmul.mubr.bf16.gmra.mrb[0].mxu0 %v305
    %v1348 = vpop.f32.mrb[0].mxu0
    %v1349 = vadd.f32 %v1306, %v1348
    %v1350 = vpop.f32.mrb[0].mxu0
    %v1351 = vadd.f32 %v1308, %v1350
    %v1352 = vpop.f32.mrb[0].mxu0
    %v1353 = vadd.f32 %v1310, %v1352
    %v1354 = vpop.f32.mrb[0].mxu0
    %v1355 = vadd.f32 %v1312, %v1354
    %1356 = vdwg.mxu0
    %1357 = vmatprep.subr.bf16.mxu0 %v890
    %1358 = vmatpush1.bf16.msra.mxu0 %v889
    %1359 = vmatprep.subr.bf16.mxu0 %v896
    %1360 = vmatpush1.bf16.msra.mxu0 %v895
    %1361 = vmatprep.subr.bf16.mxu0 %v902
    %1362 = vmatpush1.bf16.msra.mxu0 %v901
    %1363 = vmatprep.subr.bf16.mxu0 %v908
    %1364 = vmatpush1.bf16.msra.mxu0 %v907
    %1365 = vmatprep.subr.bf16.mxu0 %v914
    %1366 = vmatpush1.bf16.msra.mxu0 %v913
    %1367 = vmatprep.subr.bf16.mxu0 %v920
    %1368 = vmatpush1.bf16.msra.mxu0 %v919
    %1369 = vmatprep.subr.bf16.mxu0 %v926
    %1370 = vmatpush1.bf16.msra.mxu0 %v925
    %1371 = vmatprep.subr.bf16.mxu0 %v932
    %1372 = vmatpush1.bf16.msra.mxu0 %v931
    %1373 = vmatprep.subr.bf16.mxu0 %v938
    %1374 = vmatpush1.bf16.msra.mxu0 %v937
    %1375 = vmatprep.subr.bf16.mxu0 %v944
    %1376 = vmatpush1.bf16.msra.mxu0 %v943
    %1377 = vmatprep.subr.bf16.mxu0 %v950
    %1378 = vmatpush1.bf16.msra.mxu0 %v949
    %1379 = vmatprep.subr.bf16.mxu0 %v956
    %1380 = vmatpush1.bf16.msra.mxu0 %v955
    %1381 = vmatprep.subr.bf16.mxu0 %v962
    %1382 = vmatpush1.bf16.msra.mxu0 %v961
    %1383 = vmatprep.subr.bf16.mxu0 %v968
    %1384 = vmatpush1.bf16.msra.mxu0 %v967
    %1385 = vmatprep.subr.bf16.mxu0 %v974
    %1386 = vmatpush1.bf16.msra.mxu0 %v973
    %1387 = vmatprep.subr.bf16.mxu0 %v980
    %1388 = vmatpush1.bf16.msra.mxu0 %v979
    %1389 = vmatprep.mubr.bf16.mxu0 %v304
    %1390 = vmatmul.mubr.bf16.gmra.mrb[0].mxu0 %v303
    %v1391 = vpop.f32.mrb[0].mxu0
    %v1392 = vadd.f32 %v272, %v1391
    %v1393 = vpop.f32.mrb[0].mxu0
    %v1394 = vadd.f32 %v276, %v1393
    %v1395 = vpop.f32.mrb[0].mxu0
    %v1396 = vadd.f32 %v272, %v1395
    %v1397 = vpop.f32.mrb[0].mxu0
    %v1398 = vadd.f32 %v276, %v1397
    %1399 = vdwg.mxu0
    %1400 = vmatprep.subr.bf16.mxu0 %v986
    %1401 = vmatpush1.bf16.msra.mxu0 %v985
    %1402 = vmatprep.subr.bf16.mxu0 %v992
    %1403 = vmatpush1.bf16.msra.mxu0 %v991
    %1404 = vmatprep.subr.bf16.mxu0 %v998
    %1405 = vmatpush1.bf16.msra.mxu0 %v997
    %1406 = vmatprep.subr.bf16.mxu0 %v1004
    %1407 = vmatpush1.bf16.msra.mxu0 %v1003
    %1408 = vmatprep.subr.bf16.mxu0 %v1010
    %1409 = vmatpush1.bf16.msra.mxu0 %v1009
    %1410 = vmatprep.subr.bf16.mxu0 %v1016
    %1411 = vmatpush1.bf16.msra.mxu0 %v1015
    %1412 = vmatprep.subr.bf16.mxu0 %v1022
    %1413 = vmatpush1.bf16.msra.mxu0 %v1021
    %1414 = vmatprep.subr.bf16.mxu0 %v1028
    %1415 = vmatpush1.bf16.msra.mxu0 %v1027
    %1416 = vmatprep.subr.bf16.mxu0 %v1034
    %1417 = vmatpush1.bf16.msra.mxu0 %v1033
    %1418 = vmatprep.subr.bf16.mxu0 %v1040
    %1419 = vmatpush1.bf16.msra.mxu0 %v1039
    %1420 = vmatprep.subr.bf16.mxu0 %v1046
    %1421 = vmatpush1.bf16.msra.mxu0 %v1045
    %1422 = vmatprep.subr.bf16.mxu0 %v1052
    %1423 = vmatpush1.bf16.msra.mxu0 %v1051
    %1424 = vmatprep.subr.bf16.mxu0 %v1058
    %1425 = vmatpush1.bf16.msra.mxu0 %v1057
    %1426 = vmatprep.subr.bf16.mxu0 %v1064
    %1427 = vmatpush1.bf16.msra.mxu0 %v1063
    %1428 = vmatprep.subr.bf16.mxu0 %v1070
    %1429 = vmatpush1.bf16.msra.mxu0 %v1069
    %1430 = vmatprep.subr.bf16.mxu0 %v1076
    %1431 = vmatpush1.bf16.msra.mxu0 %v1075
    %1432 = vmatprep.mubr.bf16.mxu0 %v306
    %1433 = vmatmul.mubr.bf16.gmra.mrb[0].mxu0 %v305
    %v1434 = vpop.f32.mrb[0].mxu0
    %v1435 = vadd.f32 %v1392, %v1434
    %v1436 = vpop.f32.mrb[0].mxu0
    %v1437 = vadd.f32 %v1394, %v1436
    %v1438 = vpop.f32.mrb[0].mxu0
    %v1439 = vadd.f32 %v1396, %v1438
    %v1440 = vpop.f32.mrb[0].mxu0
    %v1441 = vadd.f32 %v1398, %v1440
    %1442 = vdwg.mxu0
    %1443 = vmatprep.subr.bf16.mxu0 %v892
    %1444 = vmatpush1.bf16.msra.mxu0 %v891
    %1445 = vmatprep.subr.bf16.mxu0 %v898
    %1446 = vmatpush1.bf16.msra.mxu0 %v897
    %1447 = vmatprep.subr.bf16.mxu0 %v904
    %1448 = vmatpush1.bf16.msra.mxu0 %v903
    %1449 = vmatprep.subr.bf16.mxu0 %v910
    %1450 = vmatpush1.bf16.msra.mxu0 %v909
    %1451 = vmatprep.subr.bf16.mxu0 %v916
    %1452 = vmatpush1.bf16.msra.mxu0 %v915
    %1453 = vmatprep.subr.bf16.mxu0 %v922
    %1454 = vmatpush1.bf16.msra.mxu0 %v921
    %1455 = vmatprep.subr.bf16.mxu0 %v928
    %1456 = vmatpush1.bf16.msra.mxu0 %v927
    %1457 = vmatprep.subr.bf16.mxu0 %v934
    %1458 = vmatpush1.bf16.msra.mxu0 %v933
    %1459 = vmatprep.subr.bf16.mxu0 %v940
    %1460 = vmatpush1.bf16.msra.mxu0 %v939
    %1461 = vmatprep.subr.bf16.mxu0 %v946
    %1462 = vmatpush1.bf16.msra.mxu0 %v945
    %1463 = vmatprep.subr.bf16.mxu0 %v952
    %1464 = vmatpush1.bf16.msra.mxu0 %v951
    %1465 = vmatprep.subr.bf16.mxu0 %v958
    %1466 = vmatpush1.bf16.msra.mxu0 %v957
    %1467 = vmatprep.subr.bf16.mxu0 %v964
    %1468 = vmatpush1.bf16.msra.mxu0 %v963
    %1469 = vmatprep.subr.bf16.mxu0 %v970
    %1470 = vmatpush1.bf16.msra.mxu0 %v969
    %1471 = vmatprep.subr.bf16.mxu0 %v976
    %1472 = vmatpush1.bf16.msra.mxu0 %v975
    %1473 = vmatprep.subr.bf16.mxu0 %v982
    %1474 = vmatpush1.bf16.msra.mxu0 %v981
    %1475 = vmatprep.mubr.bf16.mxu0 %v304
    %1476 = vmatmul.mubr.bf16.gmra.mrb[0].mxu0 %v303
    %v1477 = vpop.f32.mrb[0].mxu0
    %v1478 = vadd.f32 %v280, %v1477
    %v1479 = vpop.f32.mrb[0].mxu0
    %v1480 = vadd.f32 %v284, %v1479
    %v1481 = vpop.f32.mrb[0].mxu0
    %v1482 = vadd.f32 %v280, %v1481
    %v1483 = vpop.f32.mrb[0].mxu0
    %v1484 = vadd.f32 %v284, %v1483
    %1485 = vdwg.mxu0
    %1486 = vmatprep.subr.bf16.mxu0 %v988
    %1487 = vmatpush1.bf16.msra.mxu0 %v987
    %1488 = vmatprep.subr.bf16.mxu0 %v994
    %1489 = vmatpush1.bf16.msra.mxu0 %v993
    %1490 = vmatprep.subr.bf16.mxu0 %v1000
    %1491 = vmatpush1.bf16.msra.mxu0 %v999
    %1492 = vmatprep.subr.bf16.mxu0 %v1006
    %1493 = vmatpush1.bf16.msra.mxu0 %v1005
    %1494 = vmatprep.subr.bf16.mxu0 %v1012
    %1495 = vmatpush1.bf16.msra.mxu0 %v1011
    %1496 = vmatprep.subr.bf16.mxu0 %v1018
    %1497 = vmatpush1.bf16.msra.mxu0 %v1017
    %1498 = vmatprep.subr.bf16.mxu0 %v1024
    %1499 = vmatpush1.bf16.msra.mxu0 %v1023
    %1500 = vmatprep.subr.bf16.mxu0 %v1030
    %1501 = vmatpush1.bf16.msra.mxu0 %v1029
    %1502 = vmatprep.subr.bf16.mxu0 %v1036
    %1503 = vmatpush1.bf16.msra.mxu0 %v1035
    %1504 = vmatprep.subr.bf16.mxu0 %v1042
    %1505 = vmatpush1.bf16.msra.mxu0 %v1041
    %1506 = vmatprep.subr.bf16.mxu0 %v1048
    %1507 = vmatpush1.bf16.msra.mxu0 %v1047
    %1508 = vmatprep.subr.bf16.mxu0 %v1054
    %1509 = vmatpush1.bf16.msra.mxu0 %v1053
    %1510 = vmatprep.subr.bf16.mxu0 %v1060
    %1511 = vmatpush1.bf16.msra.mxu0 %v1059
    %1512 = vmatprep.subr.bf16.mxu0 %v1066
    %1513 = vmatpush1.bf16.msra.mxu0 %v1065
    %1514 = vmatprep.subr.bf16.mxu0 %v1072
    %1515 = vmatpush1.bf16.msra.mxu0 %v1071
    %1516 = vmatprep.subr.bf16.mxu0 %v1078
    %1517 = vmatpush1.bf16.msra.mxu0 %v1077
    %1518 = vmatprep.mubr.bf16.mxu0 %v306
    %1519 = vmatmul.mubr.bf16.gmra.mrb[0].mxu0 %v305
    %v1520 = vpop.f32.mrb[0].mxu0
    %v1521 = vadd.f32 %v1478, %v1520
    %v1522 = vpop.f32.mrb[0].mxu0
    %v1523 = vadd.f32 %v1480, %v1522
    %v1524 = vpop.f32.mrb[0].mxu0
    %v1525 = vadd.f32 %v1482, %v1524
    %v1526 = vpop.f32.mrb[0].mxu0
    %v1527 = vadd.f32 %v1484, %v1526
    %1528 = vdwg.mxu0
    %v1529 = vtanh.pop %v1349
    %v1530 = vtanh.pop %v1351
    %v1531 = vtanh.pop %v1435
    %v1532 = vtanh.pop %v1437
    %v1533 = vtanh.pop %v1521
    %v1534 = vtanh.pop %v1523
    %v1535 = vtanh.pop %v1353
    %v1536 = vtanh.pop %v1355
    %v1537 = vtanh.pop %v1439
    %v1538 = vtanh.pop %v1441
    %v1539 = vtanh.pop %v1525
    %v1540 = vtanh.pop %v1527
    %v1541 = vpack.c.bf16 %v1535, %v1529
    %v1542 = vpack.c.bf16 %v1536, %v1530
    %v1543 = vpack.c.bf16 %v1537, %v1531
    %v1544 = vpack.c.bf16 %v1538, %v1532
    %v1545 = vpack.c.bf16 %v1539, %v1533
    %v1546 = vpack.c.bf16 %v1540, %v1534
    %v1547 = vld [vmem:[#allocation7] sm:$0xf]
    %v1548 = vld [vmem:[#allocation7 + $0x4] sm:$0xf]
    %v1549 = vld [vmem:[#allocation7 + $0x8] sm:$0xf]
    %v1550 = vld [vmem:[#allocation7 + $0xc] sm:$0xf]
    %v1551 = vld [vmem:[#allocation7 + $0x10] sm:$0xf]
    %v1552 = vld [vmem:[#allocation7 + $0x14] sm:$0xf]
    %v1553 = vld [vmem:[#allocation7 + $0x18] sm:$0xf]
    %v1554 = vld [vmem:[#allocation7 + $0x1c] sm:$0xf]
    %v1555 = vld [vmem:[#allocation7 + $0x20] sm:$0xf]
    %v1556 = vld [vmem:[#allocation7 + $0x24] sm:$0xf]
    %v1557 = vld [vmem:[#allocation7 + $0x28] sm:$0xf]
    %v1558 = vld [vmem:[#allocation7 + $0x2c] sm:$0xf]
    %v1559 = vld [vmem:[#allocation7 + $0x30] sm:$0xf]
    %v1560 = vld [vmem:[#allocation7 + $0x34] sm:$0xf]
    %v1561 = vld [vmem:[#allocation7 + $0x38] sm:$0xf]
    %v1562 = vld [vmem:[#allocation7 + $0x3c] sm:$0xf]
    %v1563 = vld [vmem:[#allocation7 + $0x40] sm:$0xf]
    %v1564 = vld [vmem:[#allocation7 + $0x44] sm:$0xf]
    %v1565 = vld [vmem:[#allocation7 + $0x48] sm:$0xf]
    %v1566 = vld [vmem:[#allocation7 + $0x4c] sm:$0xf]
    %v1567 = vld [vmem:[#allocation7 + $0x50] sm:$0xf]
    %v1568 = vld [vmem:[#allocation7 + $0x54] sm:$0xf]
    %v1569 = vld [vmem:[#allocation7 + $0x58] sm:$0xf]
    %v1570 = vld [vmem:[#allocation7 + $0x5c] sm:$0xf]
    %v1571 = vld [vmem:[#allocation7 + $0x60] sm:$0xf]
    %v1572 = vld [vmem:[#allocation7 + $0x64] sm:$0xf]
    %v1573 = vld [vmem:[#allocation7 + $0x68] sm:$0xf]
    %v1574 = vld [vmem:[#allocation7 + $0x6c] sm:$0xf]
    %v1575 = vld [vmem:[#allocation7 + $0x70] sm:$0xf]
    %v1576 = vld [vmem:[#allocation7 + $0x74] sm:$0xf]
    %v1577 = vld [vmem:[#allocation7 + $0x78] sm:$0xf]
    %v1578 = vld [vmem:[#allocation7 + $0x7c] sm:$0xf]
    %v1579 = vld [vmem:[#allocation7 + $0x80] sm:$0xf]
    %v1580 = vld [vmem:[#allocation7 + $0x84] sm:$0xf]
    %v1581 = vld [vmem:[#allocation7 + $0x88] sm:$0xf]
    %v1582 = vld [vmem:[#allocation7 + $0x8c] sm:$0xf]
    %v1583 = vld [vmem:[#allocation7 + $0x90] sm:$0xf]
    %v1584 = vld [vmem:[#allocation7 + $0x94] sm:$0xf]
    %v1585 = vld [vmem:[#allocation7 + $0x98] sm:$0xf]
    %v1586 = vld [vmem:[#allocation7 + $0x9c] sm:$0xf]
    %v1587 = vld [vmem:[#allocation7 + $0xa0] sm:$0xf]
    %v1588 = vld [vmem:[#allocation7 + $0xa4] sm:$0xf]
    %v1589 = vld [vmem:[#allocation7 + $0xa8] sm:$0xf]
    %v1590 = vld [vmem:[#allocation7 + $0xac] sm:$0xf]
    %v1591 = vld [vmem:[#allocation7 + $0xb0] sm:$0xf]
    %v1592 = vld [vmem:[#allocation7 + $0xb4] sm:$0xf]
    %v1593 = vld [vmem:[#allocation7 + $0xb8] sm:$0xf]
    %v1594 = vld [vmem:[#allocation7 + $0xbc] sm:$0xf]
    %v1595 = vld [vmem:[#allocation7 + $0xc0] sm:$0xf]
    %v1596 = vld [vmem:[#allocation7 + $0xc4] sm:$0xf]
    %v1597 = vld [vmem:[#allocation7 + $0xc8] sm:$0xf]
    %v1598 = vld [vmem:[#allocation7 + $0xcc] sm:$0xf]
    %v1599 = vld [vmem:[#allocation7 + $0xd0] sm:$0xf]
    %v1600 = vld [vmem:[#allocation7 + $0xd4] sm:$0xf]
    %v1601 = vld [vmem:[#allocation7 + $0xd8] sm:$0xf]
    %v1602 = vld [vmem:[#allocation7 + $0xdc] sm:$0xf]
    %v1603 = vld [vmem:[#allocation7 + $0xe0] sm:$0xf]
    %v1604 = vld [vmem:[#allocation7 + $0xe4] sm:$0xf]
    %v1605 = vld [vmem:[#allocation7 + $0xe8] sm:$0xf]
    %v1606 = vld [vmem:[#allocation7 + $0xec] sm:$0xf]
    %v1607 = vld [vmem:[#allocation7 + $0xf0] sm:$0xf]
    %v1608 = vld [vmem:[#allocation7 + $0xf4] sm:$0xf]
    %v1609 = vld [vmem:[#allocation7 + $0xf8] sm:$0xf]
    %v1610 = vld [vmem:[#allocation7 + $0xfc] sm:$0xf]
    %v1611 = vld [vmem:[#allocation7 + $0x100] sm:$0xf]
    %v1612 = vld [vmem:[#allocation7 + $0x104] sm:$0xf]
    %v1613 = vld [vmem:[#allocation7 + $0x108] sm:$0xf]
    %v1614 = vld [vmem:[#allocation7 + $0x10c] sm:$0xf]
    %v1615 = vld [vmem:[#allocation7 + $0x110] sm:$0xf]
    %v1616 = vld [vmem:[#allocation7 + $0x114] sm:$0xf]
    %v1617 = vld [vmem:[#allocation7 + $0x118] sm:$0xf]
    %v1618 = vld [vmem:[#allocation7 + $0x11c] sm:$0xf]
    %v1619 = vld [vmem:[#allocation7 + $0x120] sm:$0xf]
    %v1620 = vld [vmem:[#allocation7 + $0x124] sm:$0xf]
    %v1621 = vld [vmem:[#allocation7 + $0x128] sm:$0xf]
    %v1622 = vld [vmem:[#allocation7 + $0x12c] sm:$0xf]
    %v1623 = vld [vmem:[#allocation7 + $0x130] sm:$0xf]
    %v1624 = vld [vmem:[#allocation7 + $0x134] sm:$0xf]
    %v1625 = vld [vmem:[#allocation7 + $0x138] sm:$0xf]
    %v1626 = vld [vmem:[#allocation7 + $0x13c] sm:$0xf]
    %v1627 = vld [vmem:[#allocation7 + $0x140] sm:$0xf]
    %v1628 = vld [vmem:[#allocation7 + $0x144] sm:$0xf]
    %v1629 = vld [vmem:[#allocation7 + $0x148] sm:$0xf]
    %v1630 = vld [vmem:[#allocation7 + $0x14c] sm:$0xf]
    %v1631 = vld [vmem:[#allocation7 + $0x150] sm:$0xf]
    %v1632 = vld [vmem:[#allocation7 + $0x154] sm:$0xf]
    %v1633 = vld [vmem:[#allocation7 + $0x158] sm:$0xf]
    %v1634 = vld [vmem:[#allocation7 + $0x15c] sm:$0xf]
    %v1635 = vld [vmem:[#allocation7 + $0x160] sm:$0xf]
    %v1636 = vld [vmem:[#allocation7 + $0x164] sm:$0xf]
    %v1637 = vld [vmem:[#allocation7 + $0x168] sm:$0xf]
    %v1638 = vld [vmem:[#allocation7 + $0x16c] sm:$0xf]
    %v1639 = vld [vmem:[#allocation7 + $0x170] sm:$0xf]
    %v1640 = vld [vmem:[#allocation7 + $0x174] sm:$0xf]
    %v1641 = vld [vmem:[#allocation7 + $0x178] sm:$0xf]
    %v1642 = vld [vmem:[#allocation7 + $0x17c] sm:$0xf]
    %v1643 = vld [vmem:[%s4] sm:$0x1]
    %v1645 = vlaneseq
    %v1646 = vshrl.u32 %v1645, 7
    %v1647 = vsub.s32 0, %v1646
    %v1648 = vrot.slane %v1643, %v1647
    %v1746 = vunpack.c.l.b16 %v1547
    %v1747 = vunpack.c.l.b16 %v1548
    %v1748 = vunpack.c.l.b16 %v1549
    %v1749 = vunpack.c.l.b16 %v1550
    %v1750 = vunpack.c.l.b16 %v1551
    %v1751 = vunpack.c.l.b16 %v1552
    %v1752 = vunpack.c.l.b16 %v1553
    %v1753 = vunpack.c.l.b16 %v1554
    %v1754 = vunpack.c.l.b16 %v1555
    %v1755 = vunpack.c.l.b16 %v1556
    %v1756 = vunpack.c.l.b16 %v1557
    %v1757 = vunpack.c.l.b16 %v1558
    %v1758 = vunpack.c.l.b16 %v1559
    %v1759 = vunpack.c.l.b16 %v1560
    %v1760 = vunpack.c.l.b16 %v1561
    %v1761 = vunpack.c.l.b16 %v1562
    %v1762 = vunpack.c.l.b16 %v1563
    %v1763 = vunpack.c.l.b16 %v1564
    %v1764 = vunpack.c.l.b16 %v1565
    %v1765 = vunpack.c.l.b16 %v1566
    %v1766 = vunpack.c.l.b16 %v1567
    %v1767 = vunpack.c.l.b16 %v1568
    %v1768 = vunpack.c.l.b16 %v1569
    %v1769 = vunpack.c.l.b16 %v1570
    %v1770 = vunpack.c.l.b16 %v1571
    %v1771 = vunpack.c.l.b16 %v1572
    %v1772 = vunpack.c.l.b16 %v1573
    %v1773 = vunpack.c.l.b16 %v1574
    %v1774 = vunpack.c.l.b16 %v1575
    %v1775 = vunpack.c.l.b16 %v1576
    %v1776 = vunpack.c.l.b16 %v1577
    %v1777 = vunpack.c.l.b16 %v1578
    %v1778 = vunpack.c.l.b16 %v1579
    %v1779 = vunpack.c.l.b16 %v1580
    %v1780 = vunpack.c.l.b16 %v1581
    %v1781 = vunpack.c.l.b16 %v1582
    %v1782 = vunpack.c.l.b16 %v1583
    %v1783 = vunpack.c.l.b16 %v1584
    %v1784 = vunpack.c.l.b16 %v1585
    %v1785 = vunpack.c.l.b16 %v1586
    %v1786 = vunpack.c.l.b16 %v1587
    %v1787 = vunpack.c.l.b16 %v1588
    %v1788 = vunpack.c.l.b16 %v1589
    %v1789 = vunpack.c.l.b16 %v1590
    %v1790 = vunpack.c.l.b16 %v1591
    %v1791 = vunpack.c.l.b16 %v1592
    %v1792 = vunpack.c.l.b16 %v1593
    %v1793 = vunpack.c.l.b16 %v1594
    %v1794 = vunpack.c.l.b16 %v1595
    %v1795 = vunpack.c.l.b16 %v1596
    %v1796 = vunpack.c.l.b16 %v1597
    %v1797 = vunpack.c.l.b16 %v1598
    %v1798 = vunpack.c.l.b16 %v1599
    %v1799 = vunpack.c.l.b16 %v1600
    %v1800 = vunpack.c.l.b16 %v1601
    %v1801 = vunpack.c.l.b16 %v1602
    %v1802 = vunpack.c.l.b16 %v1603
    %v1803 = vunpack.c.l.b16 %v1604
    %v1804 = vunpack.c.l.b16 %v1605
    %v1805 = vunpack.c.l.b16 %v1606
    %v1806 = vunpack.c.l.b16 %v1607
    %v1807 = vunpack.c.l.b16 %v1608
    %v1808 = vunpack.c.l.b16 %v1609
    %v1809 = vunpack.c.l.b16 %v1610
    %v1810 = vunpack.c.l.b16 %v1611
    %v1811 = vunpack.c.l.b16 %v1612
    %v1812 = vunpack.c.l.b16 %v1613
    %v1813 = vunpack.c.l.b16 %v1614
    %v1814 = vunpack.c.l.b16 %v1615
    %v1815 = vunpack.c.l.b16 %v1616
    %v1816 = vunpack.c.l.b16 %v1617
    %v1817 = vunpack.c.l.b16 %v1618
    %v1818 = vunpack.c.l.b16 %v1619
    %v1819 = vunpack.c.l.b16 %v1620
    %v1820 = vunpack.c.l.b16 %v1621
    %v1821 = vunpack.c.l.b16 %v1622
    %v1822 = vunpack.c.l.b16 %v1623
    %v1823 = vunpack.c.l.b16 %v1624
    %v1824 = vunpack.c.l.b16 %v1625
    %v1825 = vunpack.c.l.b16 %v1626
    %v1826 = vunpack.c.l.b16 %v1627
    %v1827 = vunpack.c.l.b16 %v1628
    %v1828 = vunpack.c.l.b16 %v1629
    %v1829 = vunpack.c.l.b16 %v1630
    %v1830 = vunpack.c.l.b16 %v1631
    %v1831 = vunpack.c.l.b16 %v1632
    %v1832 = vunpack.c.l.b16 %v1633
    %v1833 = vunpack.c.l.b16 %v1634
    %v1834 = vunpack.c.l.b16 %v1635
    %v1835 = vunpack.c.l.b16 %v1636
    %v1836 = vunpack.c.l.b16 %v1637
    %v1837 = vunpack.c.l.b16 %v1638
    %v1838 = vunpack.c.l.b16 %v1639
    %v1839 = vunpack.c.l.b16 %v1640
    %v1840 = vunpack.c.l.b16 %v1641
    %v1841 = vunpack.c.l.b16 %v1642
    %v1842 = vpack.c.b16 %v1747, %v1746
    %v1843 = vpack.c.b16 %v1749, %v1748
    %v1844 = vpack.c.b16 %v1751, %v1750
    %v1845 = vpack.c.b16 %v1753, %v1752
    %v1846 = vpack.c.b16 %v1755, %v1754
    %v1847 = vpack.c.b16 %v1757, %v1756
    %v1848 = vpack.c.b16 %v1759, %v1758
    %v1849 = vpack.c.b16 %v1761, %v1760
    %v1850 = vpack.c.b16 %v1763, %v1762
    %v1851 = vpack.c.b16 %v1765, %v1764
    %v1852 = vpack.c.b16 %v1767, %v1766
    %v1853 = vpack.c.b16 %v1769, %v1768
    %v1854 = vpack.c.b16 %v1771, %v1770
    %v1855 = vpack.c.b16 %v1773, %v1772
    %v1856 = vpack.c.b16 %v1775, %v1774
    %v1857 = vpack.c.b16 %v1777, %v1776
    %v1858 = vpack.c.b16 %v1779, %v1778
    %v1859 = vpack.c.b16 %v1781, %v1780
    %v1860 = vpack.c.b16 %v1783, %v1782
    %v1861 = vpack.c.b16 %v1785, %v1784
    %v1862 = vpack.c.b16 %v1787, %v1786
    %v1863 = vpack.c.b16 %v1789, %v1788
    %v1864 = vpack.c.b16 %v1791, %v1790
    %v1865 = vpack.c.b16 %v1793, %v1792
    %v1866 = vpack.c.b16 %v1795, %v1794
    %v1867 = vpack.c.b16 %v1797, %v1796
    %v1868 = vpack.c.b16 %v1799, %v1798
    %v1869 = vpack.c.b16 %v1801, %v1800
    %v1870 = vpack.c.b16 %v1803, %v1802
    %v1871 = vpack.c.b16 %v1805, %v1804
    %v1872 = vpack.c.b16 %v1807, %v1806
    %v1873 = vpack.c.b16 %v1809, %v1808
    %v1874 = vpack.c.b16 %v1811, %v1810
    %v1875 = vpack.c.b16 %v1813, %v1812
    %v1876 = vpack.c.b16 %v1815, %v1814
    %v1877 = vpack.c.b16 %v1817, %v1816
    %v1878 = vpack.c.b16 %v1819, %v1818
    %v1879 = vpack.c.b16 %v1821, %v1820
    %v1880 = vpack.c.b16 %v1823, %v1822
    %v1881 = vpack.c.b16 %v1825, %v1824
    %v1882 = vpack.c.b16 %v1827, %v1826
    %v1883 = vpack.c.b16 %v1829, %v1828
    %v1884 = vpack.c.b16 %v1831, %v1830
    %v1885 = vpack.c.b16 %v1833, %v1832
    %v1886 = vpack.c.b16 %v1835, %v1834
    %v1887 = vpack.c.b16 %v1837, %v1836
    %v1888 = vpack.c.b16 %v1839, %v1838
    %v1889 = vpack.c.b16 %v1841, %v1840
    %1938 = vmatprep.subr.bf16.mxu0 0
    %1939 = vmatpush1.bf16.msra.mxu0 %v1842
    %1940 = vmatprep.subr.bf16.mxu0 0
    %1941 = vmatpush1.bf16.msra.mxu0 %v1843
    %1942 = vmatprep.subr.bf16.mxu0 0
    %1943 = vmatpush1.bf16.msra.mxu0 %v1844
    %1944 = vmatprep.subr.bf16.mxu0 0
    %1945 = vmatpush1.bf16.msra.mxu0 %v1845
    %1946 = vmatprep.subr.bf16.mxu0 0
    %1947 = vmatpush1.bf16.msra.mxu0 %v1846
    %1948 = vmatprep.subr.bf16.mxu0 0
    %1949 = vmatpush1.bf16.msra.mxu0 %v1847
    %1950 = vmatprep.subr.bf16.mxu0 0
    %1951 = vmatpush1.bf16.msra.mxu0 %v1848
    %1952 = vmatprep.subr.bf16.mxu0 0
    %1953 = vmatpush1.bf16.msra.mxu0 %v1849
    %1954 = vmatprep.subr.bf16.mxu0 0
    %1955 = vmatpush1.bf16.msra.mxu0 %v1850
    %1956 = vmatprep.subr.bf16.mxu0 0
    %1957 = vmatpush1.bf16.msra.mxu0 %v1851
    %1958 = vmatprep.subr.bf16.mxu0 0
    %1959 = vmatpush1.bf16.msra.mxu0 %v1852
    %1960 = vmatprep.subr.bf16.mxu0 0
    %1961 = vmatpush1.bf16.msra.mxu0 %v1853
    %1962 = vmatprep.subr.bf16.mxu0 0
    %1963 = vmatpush1.bf16.msra.mxu0 %v1854
    %1964 = vmatprep.subr.bf16.mxu0 0
    %1965 = vmatpush1.bf16.msra.mxu0 %v1855
    %1966 = vmatprep.subr.bf16.mxu0 0
    %1967 = vmatpush1.bf16.msra.mxu0 %v1856
    %1968 = vmatprep.subr.bf16.mxu0 0
    %1969 = vmatpush1.bf16.msra.mxu0 %v1857
    %1970 = vmatprep.mubr.bf16.mxu0 %v1542
    %1971 = vmatmul.mubr.bf16.gmra.mrb[0].mxu0 %v1541
    %v1972 = vpop.f32.mrb[0].mxu0
    %v1973 = vadd.f32 %v1648, %v1972
    %v1974 = vpop.f32.mrb[0].mxu0
    %v1975 = vpop.f32.mrb[0].mxu0
    %v1976 = vadd.f32 %v1648, %v1975
    %v1977 = vpop.f32.mrb[0].mxu0
    %1978 = vdwg.mxu0
    %1979 = vmatprep.subr.bf16.mxu0 0
    %1980 = vmatpush1.bf16.msra.mxu0 %v1858
    %1981 = vmatprep.subr.bf16.mxu0 0
    %1982 = vmatpush1.bf16.msra.mxu0 %v1859
    %1983 = vmatprep.subr.bf16.mxu0 0
    %1984 = vmatpush1.bf16.msra.mxu0 %v1860
    %1985 = vmatprep.subr.bf16.mxu0 0
    %1986 = vmatpush1.bf16.msra.mxu0 %v1861
    %1987 = vmatprep.subr.bf16.mxu0 0
    %1988 = vmatpush1.bf16.msra.mxu0 %v1862
    %1989 = vmatprep.subr.bf16.mxu0 0
    %1990 = vmatpush1.bf16.msra.mxu0 %v1863
    %1991 = vmatprep.subr.bf16.mxu0 0
    %1992 = vmatpush1.bf16.msra.mxu0 %v1864
    %1993 = vmatprep.subr.bf16.mxu0 0
    %1994 = vmatpush1.bf16.msra.mxu0 %v1865
    %1995 = vmatprep.subr.bf16.mxu0 0
    %1996 = vmatpush1.bf16.msra.mxu0 %v1866
    %1997 = vmatprep.subr.bf16.mxu0 0
    %1998 = vmatpush1.bf16.msra.mxu0 %v1867
    %1999 = vmatprep.subr.bf16.mxu0 0
    %2000 = vmatpush1.bf16.msra.mxu0 %v1868
    %2001 = vmatprep.subr.bf16.mxu0 0
    %2002 = vmatpush1.bf16.msra.mxu0 %v1869
    %2003 = vmatprep.subr.bf16.mxu0 0
    %2004 = vmatpush1.bf16.msra.mxu0 %v1870
    %2005 = vmatprep.subr.bf16.mxu0 0
    %2006 = vmatpush1.bf16.msra.mxu0 %v1871
    %2007 = vmatprep.subr.bf16.mxu0 0
    %2008 = vmatpush1.bf16.msra.mxu0 %v1872
    %2009 = vmatprep.subr.bf16.mxu0 0
    %2010 = vmatpush1.bf16.msra.mxu0 %v1873
    %2011 = vmatprep.mubr.bf16.mxu0 %v1544
    %2012 = vmatmul.mubr.bf16.gmra.mrb[0].mxu0 %v1543
    %v2013 = vpop.f32.mrb[0].mxu0
    %v2014 = vadd.f32 %v1973, %v2013
    %v2015 = vpop.f32.mrb[0].mxu0
    %v2016 = vpop.f32.mrb[0].mxu0
    %v2017 = vadd.f32 %v1976, %v2016
    %v2018 = vpop.f32.mrb[0].mxu0
    %2019 = vdwg.mxu0
    %2020 = vmatprep.subr.bf16.mxu0 0
    %2021 = vmatpush1.bf16.msra.mxu0 %v1874
    %2022 = vmatprep.subr.bf16.mxu0 0
    %2023 = vmatpush1.bf16.msra.mxu0 %v1875
    %2024 = vmatprep.subr.bf16.mxu0 0
    %2025 = vmatpush1.bf16.msra.mxu0 %v1876
    %2026 = vmatprep.subr.bf16.mxu0 0
    %2027 = vmatpush1.bf16.msra.mxu0 %v1877
    %2028 = vmatprep.subr.bf16.mxu0 0
    %2029 = vmatpush1.bf16.msra.mxu0 %v1878
    %2030 = vmatprep.subr.bf16.mxu0 0
    %2031 = vmatpush1.bf16.msra.mxu0 %v1879
    %2032 = vmatprep.subr.bf16.mxu0 0
    %2033 = vmatpush1.bf16.msra.mxu0 %v1880
    %2034 = vmatprep.subr.bf16.mxu0 0
    %2035 = vmatpush1.bf16.msra.mxu0 %v1881
    %2036 = vmatprep.subr.bf16.mxu0 0
    %2037 = vmatpush1.bf16.msra.mxu0 %v1882
    %2038 = vmatprep.subr.bf16.mxu0 0
    %2039 = vmatpush1.bf16.msra.mxu0 %v1883
    %2040 = vmatprep.subr.bf16.mxu0 0
    %2041 = vmatpush1.bf16.msra.mxu0 %v1884
    %2042 = vmatprep.subr.bf16.mxu0 0
    %2043 = vmatpush1.bf16.msra.mxu0 %v1885
    %2044 = vmatprep.subr.bf16.mxu0 0
    %2045 = vmatpush1.bf16.msra.mxu0 %v1886
    %2046 = vmatprep.subr.bf16.mxu0 0
    %2047 = vmatpush1.bf16.msra.mxu0 %v1887
    %2048 = vmatprep.subr.bf16.mxu0 0
    %2049 = vmatpush1.bf16.msra.mxu0 %v1888
    %2050 = vmatprep.subr.bf16.mxu0 0
    %2051 = vmatpush1.bf16.msra.mxu0 %v1889
    %2052 = vmatprep.mubr.bf16.mxu0 %v1546
    %2053 = vmatmul.mubr.bf16.gmra.mrb[0].mxu0 %v1545
    %v2054 = vpop.f32.mrb[0].mxu0
    %v2055 = vadd.f32 %v2014, %v2054
    %v2056 = vpop.f32.mrb[0].mxu0
    %v2057 = vpop.f32.mrb[0].mxu0
    %v2058 = vadd.f32 %v2017, %v2057
    %v2059 = vpop.f32.mrb[0].mxu0
    %2060 = vdwg.mxu0
    %2061 = vst [vmem:[#allocation8] sm:$0xff] %v2055
    %2062 = vst [vmem:[#allocation8 + $0x8] sm:$0xff] %v2058
    // Predicated region
    $region34: #{tpu_custom_call.1} parent=1 // pred_check
      _
    $region35: #{tpu_custom_call.1} parent=1 // pred_check_branch
      %2064 = sbr.rel (0) target = $region37
    $region36: #{tpu_custom_call.1} parent=1 // pred_region
      %s2066 = ssub.s32 256, 256
      %2067 = vsyncadd [#allocation4], %s2066
      %s2068 = sshll.u32 [#allocation8], 4
      %s2069 = int_to_ptr.vmem [resolvable:$true] %s2068
      %2074 = dma.vmem_to_hbm [thread:$0]  %s2069, 256, %s5, [#allocation4], 128, 128, 8
    $region37: #{tpu_custom_call.1} parent=1 // pred_fallthru
      _
    // Predicated region
    $region38: #{tpu_custom_call.1} parent=1 // pred_check
      _
    $region39: #{tpu_custom_call.1} parent=1 // pred_check_branch
      %2076 = sbr.rel (0) target = $region41
    $region40: #{tpu_custom_call.1} parent=1 // pred_region
      %2077 = dma.done [#allocation4], 256
    $region41: #{tpu_custom_call.1} parent=1 // pred_fallthru
      _
    %2078 = vsyncpa [#allocation3], 1
    %2079 = vsyncpa [#allocation6], 1
    %2080 = vsyncpa [#allocation4], 1

</llo_original>
